<compile_context>
chip_gen: v7x
topology: tpu7x:2x2x1
jax: 0.10.0
libtpu: 0.0.40
codegen_flags: <defaults>
</compile_context>

<pallas_src>
import math

import numpy as np
import jax
import jax.numpy as jnp
from jax import lax
from jax.experimental import pallas as pl
from jax.experimental.pallas import tpu as pltpu


# ----------------------------- config ---------------------------------------
BATCH = 2
SEQ_LEN = 8             # T
D_MODEL = 32            # dim
NUM_HEADS = 4
HEAD_DIM = D_MODEL // NUM_HEADS
MLP_SCALE = 4
INTER_DIM = MLP_SCALE * D_MODEL
ROPE_THETA = 10000.0
LN_EPS = 1e-5           # nn.LayerNorm default


# --------------------- parameter / constant setup ----------------------------
def init_params(key):
    """Deterministic parameter init (shapes follow the PyTorch __init__)."""
    def lin(k, fan_in, fan_out):
        kw, kb = jax.random.split(k)
        w = jax.random.normal(kw, (fan_in, fan_out), jnp.float32) / np.sqrt(fan_in)
        b = 0.01 * jax.random.normal(kb, (fan_out,), jnp.float32)
        return w, b

    keys = jax.random.split(key, 11)
    p = {}
    p["Wq"], p["bq"] = lin(keys[0], D_MODEL, D_MODEL)
    p["Wk"], p["bk"] = lin(keys[1], D_MODEL, D_MODEL)
    p["Wv"], p["bv"] = lin(keys[2], D_MODEL, D_MODEL)
    p["Wo"], p["bo"] = lin(keys[3], D_MODEL, D_MODEL)      # c_proj (bias assumed True)
    p["W1"], p["c1"] = lin(keys[4], D_MODEL, INTER_DIM)    # MLP.w1
    p["W2"], p["c2"] = lin(keys[5], INTER_DIM, D_MODEL)    # MLP.w2
    p["W3"], p["c3"] = lin(keys[6], D_MODEL, INTER_DIM)    # MLP.w3
    p["g1"] = 1.0 + 0.1 * jax.random.normal(keys[7], (D_MODEL,), jnp.float32)   # attn_norm
    p["be1"] = 0.05 * jax.random.normal(keys[8], (D_MODEL,), jnp.float32)
    p["g2"] = 1.0 + 0.1 * jax.random.normal(keys[9], (D_MODEL,), jnp.float32)   # mlp_norm
    p["be2"] = 0.05 * jax.random.normal(keys[10], (D_MODEL,), jnp.float32)
    return p


def build_constants(seq_len, d_model, num_heads, batch, rope_theta):
    """Precompute (outside the kernel):
       * rot:  (D, D) block-diagonal signed permutation so that  x @ rot == rotate_half(x)
               applied independently within each head's slice,
       * cs:   (B*T, 2D) packed [cos | sin] RoPE factors (tiled over heads & batch),
       * mask: (B*T, B*T) additive bias: 0 where (same batch & key_pos <= query_pos), else -1e30.
    """
    T, D, H = seq_len, d_model, num_heads
    hd = D // H
    half = hd // 2
    rows = batch * T

    rh = np.zeros((hd, hd), np.float32)
    for i in range(half):
        rh[i + half, i] = -1.0      # out[:, i]        = -x[:, i+half]
        rh[i, i + half] = 1.0       # out[:, i+half]   =  x[:, i]
    rot = np.kron(np.eye(H, dtype=np.float32), rh)                     # (D, D)

    inv_freq = 1.0 / (rope_theta ** (np.arange(0, hd, 2, dtype=np.float64) / hd))
    ang = np.arange(T, dtype=np.float64)[:, None] * inv_freq[None, :]  # (T, hd/2)
    cos_h = np.concatenate([np.cos(ang), np.cos(ang)], axis=-1)        # (T, hd)
    sin_h = np.concatenate([np.sin(ang), np.sin(ang)], axis=-1)
    cos_f = np.tile(np.tile(cos_h, (1, H)), (batch, 1))                # (rows, D)
    sin_f = np.tile(np.tile(sin_h, (1, H)), (batch, 1))
    cs = np.concatenate([cos_f, sin_f], axis=-1).astype(np.float32)    # (rows, 2D)

    r = np.arange(rows)
    same_b = (r[:, None] // T) == (r[None, :] // T)
    causal = (r[None, :] % T) <= (r[:, None] % T)
    mask = np.where(same_b & causal, 0.0, -1e30).astype(np.float32)    # (rows, rows)

    return jnp.asarray(rot), jnp.asarray(cs), jnp.asarray(mask)


# ------------------------------ Pallas kernel --------------------------------
def _make_kernel(d_model, num_heads, inter_dim):
    head_dim = d_model // num_heads
    scale = 1.0 / math.sqrt(head_dim)

    def layer_norm(v, g, b):
        mu = jnp.mean(v, axis=-1, keepdims=True)
        var = jnp.mean((v - mu) ** 2, axis=-1, keepdims=True)
        return (v - mu) * lax.rsqrt(var + LN_EPS) * g + b

    def kernel(x_ref, wqkv_ref, bqkv_ref, rwo_ref, w13_ref, c13_ref,
               w2_ref, vec_ref, cs_ref, mask_ref, out_ref):
        f32 = jnp.float32
        bf16 = jnp.bfloat16
        D = d_model

        x = x_ref[...]                                   # (B*T, D) f32
        g1 = vec_ref[0:1, :]
        be1 = vec_ref[1:2, :]
        g2 = vec_ref[2:3, :]
        be2 = vec_ref[3:4, :]
        bo = vec_ref[4:5, :]
        c2 = vec_ref[5:6, :]

        # ---- attn_norm ----
        h = layer_norm(x, g1, be1)

        # ---- fused q/k/v projection (one wide MXU matmul) ----
        qkv = jnp.dot(h, wqkv_ref[...], preferred_element_type=f32) + bqkv_ref[...]
        q = qkv[:, 0:D]
        k = qkv[:, D:2 * D]
        v = qkv[:, 2 * D:3 * D]

        # ---- RoPE: x*cos + rotate_half(x)*sin, rotate_half via signed-permutation matmul ----
        cos = cs_ref[:, 0:D]
        sin = cs_ref[:, D:2 * D]
        rot = rwo_ref[0]
        q = q * cos + jnp.dot(q, rot, preferred_element_type=f32) * sin
        k = k * cos + jnp.dot(k, rot, preferred_element_type=f32) * sin

        # ---- causal multi-head softmax attention (bf16 MXU operands, f32 accumulate) ----
        mask_bias = mask_ref[...]                        # (B*T, B*T) precomputed
        heads = []
        for hh in range(num_heads):
            lo = hh * head_dim
            qh = q[:, lo:lo + head_dim].astype(bf16)
            kh = k[:, lo:lo + head_dim].astype(bf16)
            vh = v[:, lo:lo + head_dim].astype(bf16)
            s = lax.dot_general(qh, kh, (((1,), (1,)), ((), ())),
                                preferred_element_type=f32) * scale + mask_bias
            m = jnp.max(s, axis=-1, keepdims=True)
            p = jnp.exp(s - m)
            denom = jnp.sum(p, axis=-1, keepdims=True)
            probs = p * pl.reciprocal(denom, approx=True)
            heads.append(jnp.dot(probs.astype(bf16), vh, preferred_element_type=f32))
        y = jnp.concatenate(heads, axis=-1)              # (B*T, D)

        # ---- output projection + first residual ----
        x2 = x + jnp.dot(y, rwo_ref[1], preferred_element_type=f32) + bo

        # ---- MLP: w2(gelu_tanh(w1(m)) * w3(m)) + second residual ----
        m2 = layer_norm(x2, g2, be2)
        h13 = jnp.dot(m2, w13_ref[...], preferred_element_type=f32) + c13_ref[...]
        h1 = h13[:, 0:inter_dim]
        h3 = h13[:, inter_dim:2 * inter_dim]
        gelu = 0.5 * h1 * (1.0 + jnp.tanh(0.7978845608028654 * (h1 + 0.044715 * h1 * h1 * h1)))
        out_ref[...] = x2 + jnp.dot(gelu * h3, w2_ref[...], preferred_element_type=f32) + c2

    return kernel


def attention_layer(x, params, *, num_heads=NUM_HEADS, rope_theta=ROPE_THETA):
    B, T, D = x.shape
    inter = params["W1"].shape[1]
    rows = B * T

    rot, cs, mask = build_constants(T, D, num_heads, B, rope_theta)

    # ---- pack parameters (22 tiny DMAs -> 10 inputs) ----
    wqkv = jnp.concatenate([params["Wq"], params["Wk"], params["Wv"]], axis=1)   # (D, 3D)
    bqkv = jnp.concatenate([params["bq"], params["bk"], params["bv"]]).reshape(1, -1)
    rwo = jnp.stack([rot, params["Wo"]])                                         # (2, D, D)
    w13 = jnp.concatenate([params["W1"], params["W3"]], axis=1)                  # (D, 2*inter)
    c13 = jnp.concatenate([params["c1"], params["c3"]]).reshape(1, -1)
    zero_row = jnp.zeros((D,), jnp.float32)
    vecs = jnp.stack([params["g1"], params["be1"], params["g2"], params["be2"],
                      params["bo"], params["c2"], zero_row, zero_row])           # (8, D)

    x2d = x.reshape(rows, D)
    inputs = [x2d, wqkv, bqkv, rwo, w13, c13, params["W2"], vecs, cs, mask]

    def const_spec(a):
        zeros = (0,) * a.ndim
        return pl.BlockSpec(a.shape, lambda i: zeros)

    in_specs = [pl.BlockSpec((rows, D), lambda i: (i, 0))] + [const_spec(a) for a in inputs[1:]]

    kernel = _make_kernel(D, num_heads, inter)
    out = pl.pallas_call(
        kernel,
        out_shape=jax.ShapeDtypeStruct((rows, D), jnp.float32),
        grid_spec=pltpu.PrefetchScalarGridSpec(
            num_scalar_prefetch=0,
            grid=(1,),          # whole batch in one step (best on the 1-TC v5e/v6e);
                                # for v7x megacore, shard a (num_cores,) leading axis instead.
            in_specs=in_specs,
            out_specs=pl.BlockSpec((rows, D), lambda i: (i, 0)),
        ),
        compiler_params=pltpu.CompilerParams(dimension_semantics=("parallel",)),
    )(*inputs)
    return out.reshape(B, T, D)


# ------------------- pure-numpy reference (mirrors torch code) ----------------
def _bf16_round(a):
    """Emulate torch's .to(torch.bfloat16) used for flash-attention inputs."""
    return np.asarray(
        jnp.asarray(np.asarray(a, np.float32)).astype(jnp.bfloat16).astype(jnp.float32),
        dtype=np.float64)


def reference_forward_np(x, p, *, num_heads, rope_theta):
    x = np.asarray(x, np.float64)
    B, T, D = x.shape
    H = num_heads
    hd = D // H
    half = hd // 2

    def g(n):
        return np.asarray(p[n], np.float64)

    def ln(v, gamma, beta):
        mu = v.mean(-1, keepdims=True)
        var = ((v - mu) ** 2).mean(-1, keepdims=True)
        return (v - mu) / np.sqrt(var + LN_EPS) * gamma + beta

    # --- attention block ---
    h = ln(x, g("g1"), g("be1"))
    q = (h @ g("Wq") + g("bq")).reshape(B, T, H, hd)
    k = (h @ g("Wk") + g("bk")).reshape(B, T, H, hd)
    v = (h @ g("Wv") + g("bv")).reshape(B, T, H, hd)

    inv_freq = 1.0 / (rope_theta ** (np.arange(0, hd, 2, dtype=np.float64) / hd))
    ang = np.arange(T, dtype=np.float64)[:, None] * inv_freq[None, :]
    cos = np.concatenate([np.cos(ang), np.cos(ang)], -1)[None, :, None, :]  # (1,T,1,hd)
    sin = np.concatenate([np.sin(ang), np.sin(ang)], -1)[None, :, None, :]

    def rot_half(a):
        return np.concatenate([-a[..., half:], a[..., :half]], -1)

    q = q * cos + rot_half(q) * sin
    k = k * cos + rot_half(k) * sin

    qb, kb, vb = _bf16_round(q), _bf16_round(k), _bf16_round(v)
    scores = np.einsum("bthd,bshd->bhts", qb, kb) / np.sqrt(hd)
    causal = np.tril(np.ones((T, T), bool))
    scores = np.where(causal[None, None], scores, -np.inf)
    scores = scores - scores.max(-1, keepdims=True)
    pr = np.exp(scores)
    pr = pr / pr.sum(-1, keepdims=True)
    pr = _bf16_round(pr)                                  # flash-attn keeps P in input dtype
    y = np.einsum("bhts,bshd->bthd", pr, vb).reshape(B, T, D)

    attn_out = y @ g("Wo") + g("bo")
    x2 = x + attn_out

    # --- MLP block ---
    m = ln(x2, g("g2"), g("be2"))
    h1 = m @ g("W1") + g("c1")
    h3 = m @ g("W3") + g("c3")
    gelu = 0.5 * h1 * (1.0 + np.tanh(np.sqrt(2.0 / np.pi) * (h1 + 0.044715 * h1 ** 3)))
    return x2 + (gelu * h3) @ g("W2") + g("c2")


# ------------------------------------ main ------------------------------------
if __name__ == "__main__":
    key = jax.random.PRNGKey(0)
    k_x, k_p = jax.random.split(key)
    params = init_params(k_p)
    x = jax.random.normal(k_x, (BATCH, SEQ_LEN, D_MODEL), jnp.float32)

    out = attention_layer(x, params, num_heads=NUM_HEADS, rope_theta=ROPE_THETA)
    out = jax.block_until_ready(out)

    ref = reference_forward_np(np.asarray(x),
                               {k_: np.asarray(v_) for k_, v_ in params.items()},
                               num_heads=NUM_HEADS, rope_theta=ROPE_THETA)
    assert out.shape == (BATCH, SEQ_LEN, D_MODEL)
    assert np.all(np.isfinite(np.asarray(out)))
    np.testing.assert_allclose(np.asarray(out), ref, rtol=2e-2, atol=2e-2)
    print("KERNEL_OK")
</pallas_src>

<mosaic_0001>
module attributes {stable_mosaic.version = 11 : i64} {
  func.func @kernel(%arg0: i32, %arg1: memref<16x32xf32, #tpu.memory_space<vmem>>, %arg2: memref<32x96xf32, #tpu.memory_space<vmem>>, %arg3: memref<1x96xf32, #tpu.memory_space<vmem>>, %arg4: memref<2x32x32xf32, #tpu.memory_space<vmem>>, %arg5: memref<32x256xf32, #tpu.memory_space<vmem>>, %arg6: memref<1x256xf32, #tpu.memory_space<vmem>>, %arg7: memref<128x32xf32, #tpu.memory_space<vmem>>, %arg8: memref<8x32xf32, #tpu.memory_space<vmem>>, %arg9: memref<16x64xf32, #tpu.memory_space<vmem>>, %arg10: memref<16x16xf32, #tpu.memory_space<vmem>>, %arg11: memref<16x32xf32, #tpu.memory_space<vmem>>) attributes {dimension_semantics = [#tpu.dimension_semantics<parallel>], iteration_bounds = array<i64: 1>, scalar_prefetch = 0 : i64, scratch_operands = 0 : i64, tpu.core_type = #tpu.core_type<tc>, window_params = [{transform_indices = @transform_0, window_bounds = array<i64: 16, 32>}, {pipeline_mode = #tpu.pipeline_mode<synchronous>, transform_indices = @transform_1, window_bounds = array<i64: 32, 96>}, {pipeline_mode = #tpu.pipeline_mode<synchronous>, transform_indices = @transform_2, window_bounds = array<i64: 1, 96>}, {pipeline_mode = #tpu.pipeline_mode<synchronous>, transform_indices = @transform_3, window_bounds = array<i64: 2, 32, 32>}, {pipeline_mode = #tpu.pipeline_mode<synchronous>, transform_indices = @transform_4, window_bounds = array<i64: 32, 256>}, {pipeline_mode = #tpu.pipeline_mode<synchronous>, transform_indices = @transform_5, window_bounds = array<i64: 1, 256>}, {pipeline_mode = #tpu.pipeline_mode<synchronous>, transform_indices = @transform_6, window_bounds = array<i64: 128, 32>}, {pipeline_mode = #tpu.pipeline_mode<synchronous>, transform_indices = @transform_7, window_bounds = array<i64: 8, 32>}, {pipeline_mode = #tpu.pipeline_mode<synchronous>, transform_indices = @transform_8, window_bounds = array<i64: 16, 64>}, {pipeline_mode = #tpu.pipeline_mode<synchronous>, transform_indices = @transform_9, window_bounds = array<i64: 16, 16>}, {transform_indices = @transform_10, window_bounds = array<i64: 16, 32>}]} {
    %c0 = arith.constant 0 : index
    %c0_0 = arith.constant 0 : index
    %0 = vector.load %arg1[%c0, %c0_0] : memref<16x32xf32, #tpu.memory_space<vmem>>, vector<16x32xf32>
    %c0_1 = arith.constant 0 : index
    %c0_2 = arith.constant 0 : index
    %1 = vector.load %arg8[%c0_1, %c0_2] : memref<8x32xf32, #tpu.memory_space<vmem>>, vector<1x32xf32>
    %c1 = arith.constant 1 : index
    %c0_3 = arith.constant 0 : index
    %2 = vector.load %arg8[%c1, %c0_3] : memref<8x32xf32, #tpu.memory_space<vmem>>, vector<1x32xf32>
    %c2 = arith.constant 2 : index
    %c0_4 = arith.constant 0 : index
    %3 = vector.load %arg8[%c2, %c0_4] : memref<8x32xf32, #tpu.memory_space<vmem>>, vector<1x32xf32>
    %c3 = arith.constant 3 : index
    %c0_5 = arith.constant 0 : index
    %4 = vector.load %arg8[%c3, %c0_5] : memref<8x32xf32, #tpu.memory_space<vmem>>, vector<1x32xf32>
    %c4 = arith.constant 4 : index
    %c0_6 = arith.constant 0 : index
    %5 = vector.load %arg8[%c4, %c0_6] : memref<8x32xf32, #tpu.memory_space<vmem>>, vector<1x32xf32>
    %c5 = arith.constant 5 : index
    %c0_7 = arith.constant 0 : index
    %6 = vector.load %arg8[%c5, %c0_7] : memref<8x32xf32, #tpu.memory_space<vmem>>, vector<1x32xf32>
    %cst = arith.constant dense<0.000000e+00> : vector<16xf32>
    %7 = vector.multi_reduction <add>, %0, %cst [1] : vector<16x32xf32> to vector<16xf32>
    %8 = vector.shape_cast %7 : vector<16xf32> to vector<16x1xf32>
    %cst_8 = arith.constant 3.200000e+01 : f32
    %9 = vector.broadcast %cst_8 : f32 to vector<16x1xf32>
    %10 = arith.divf %8, %9 : vector<16x1xf32>
    %11 = vector.broadcast %10 : vector<16x1xf32> to vector<16x32xf32>
    %12 = arith.subf %0, %11 : vector<16x32xf32>
    %13 = arith.mulf %12, %12 : vector<16x32xf32>
    %cst_9 = arith.constant dense<0.000000e+00> : vector<16xf32>
    %14 = vector.multi_reduction <add>, %13, %cst_9 [1] : vector<16x32xf32> to vector<16xf32>
    %15 = vector.shape_cast %14 : vector<16xf32> to vector<16x1xf32>
    %cst_10 = arith.constant 3.200000e+01 : f32
    %16 = vector.broadcast %cst_10 : f32 to vector<16x1xf32>
    %17 = arith.divf %15, %16 : vector<16x1xf32>
    %18 = vector.broadcast %10 : vector<16x1xf32> to vector<16x32xf32>
    %19 = arith.subf %0, %18 : vector<16x32xf32>
    %cst_11 = arith.constant 9.99999974E-6 : f32
    %20 = vector.broadcast %cst_11 : f32 to vector<16x1xf32>
    %21 = arith.addf %17, %20 : vector<16x1xf32>
    %22 = math.rsqrt %21 : vector<16x1xf32>
    %23 = vector.broadcast %22 : vector<16x1xf32> to vector<16x32xf32>
    %24 = arith.mulf %19, %23 : vector<16x32xf32>
    %25 = vector.broadcast %1 : vector<1x32xf32> to vector<16x32xf32>
    %26 = arith.mulf %24, %25 : vector<16x32xf32>
    %27 = vector.broadcast %2 : vector<1x32xf32> to vector<16x32xf32>
    %28 = arith.addf %26, %27 : vector<16x32xf32>
    %c0_12 = arith.constant 0 : index
    %c0_13 = arith.constant 0 : index
    %29 = vector.load %arg2[%c0_12, %c0_13] : memref<32x96xf32, #tpu.memory_space<vmem>>, vector<32x96xf32>
    %cst_14 = arith.constant dense<0.000000e+00> : vector<16x96xf32>
    %30 = tpu.matmul %28, %29, %cst_14 {dimension_numbers = #tpu.dot_dimension_numbers<[1], [0], [0], [1], [0, 0, 1, 1], [], []>} : vector<16x32xf32>, vector<32x96xf32>, vector<16x96xf32> -> vector<16x96xf32>
    %c0_15 = arith.constant 0 : index
    %c0_16 = arith.constant 0 : index
    %31 = vector.load %arg3[%c0_15, %c0_16] : memref<1x96xf32, #tpu.memory_space<vmem>>, vector<1x96xf32>
    %32 = vector.broadcast %31 : vector<1x96xf32> to vector<16x96xf32>
    %33 = arith.addf %30, %32 : vector<16x96xf32>
    %34 = vector.extract_strided_slice %33 {offsets = [0, 0], sizes = [16, 32], strides = [1, 1]} : vector<16x96xf32> to vector<16x32xf32>
    %35 = vector.extract_strided_slice %33 {offsets = [0, 32], sizes = [16, 32], strides = [1, 1]} : vector<16x96xf32> to vector<16x32xf32>
    %36 = vector.extract_strided_slice %33 {offsets = [0, 64], sizes = [16, 32], strides = [1, 1]} : vector<16x96xf32> to vector<16x32xf32>
    %c0_17 = arith.constant 0 : index
    %c0_18 = arith.constant 0 : index
    %37 = vector.load %arg9[%c0_17, %c0_18] : memref<16x64xf32, #tpu.memory_space<vmem>>, vector<16x32xf32>
    %c0_19 = arith.constant 0 : index
    %c32 = arith.constant 32 : index
    %38 = vector.load %arg9[%c0_19, %c32] : memref<16x64xf32, #tpu.memory_space<vmem>>, vector<16x32xf32>
    %c0_20 = arith.constant 0 : index
    %c0_21 = arith.constant 0 : index
    %c0_22 = arith.constant 0 : index
    %39 = vector.load %arg4[%c0_20, %c0_21, %c0_22] : memref<2x32x32xf32, #tpu.memory_space<vmem>>, vector<1x32x32xf32>
    %40 = vector.shape_cast %39 : vector<1x32x32xf32> to vector<32x32xf32>
    %41 = arith.mulf %34, %37 : vector<16x32xf32>
    %cst_23 = arith.constant dense<0.000000e+00> : vector<16x32xf32>
    %42 = tpu.matmul %34, %40, %cst_23 {dimension_numbers = #tpu.dot_dimension_numbers<[1], [0], [0], [1], [0, 0, 1, 1], [], []>} : vector<16x32xf32>, vector<32x32xf32>, vector<16x32xf32> -> vector<16x32xf32>
    %43 = arith.mulf %42, %38 : vector<16x32xf32>
    %44 = arith.addf %41, %43 : vector<16x32xf32>
    %45 = arith.mulf %35, %37 : vector<16x32xf32>
    %cst_24 = arith.constant dense<0.000000e+00> : vector<16x32xf32>
    %46 = tpu.matmul %35, %40, %cst_24 {dimension_numbers = #tpu.dot_dimension_numbers<[1], [0], [0], [1], [0, 0, 1, 1], [], []>} : vector<16x32xf32>, vector<32x32xf32>, vector<16x32xf32> -> vector<16x32xf32>
    %47 = arith.mulf %46, %38 : vector<16x32xf32>
    %48 = arith.addf %45, %47 : vector<16x32xf32>
    %c0_25 = arith.constant 0 : index
    %c0_26 = arith.constant 0 : index
    %49 = vector.load %arg10[%c0_25, %c0_26] : memref<16x16xf32, #tpu.memory_space<vmem>>, vector<16x16xf32>
    %50 = vector.extract_strided_slice %44 {offsets = [0, 0], sizes = [16, 8], strides = [1, 1]} : vector<16x32xf32> to vector<16x8xf32>
    %51 = arith.truncf %50 : vector<16x8xf32> to vector<16x8xbf16>
    %52 = vector.extract_strided_slice %48 {offsets = [0, 0], sizes = [16, 8], strides = [1, 1]} : vector<16x32xf32> to vector<16x8xf32>
    %53 = arith.truncf %52 : vector<16x8xf32> to vector<16x8xbf16>
    %54 = vector.extract_strided_slice %36 {offsets = [0, 0], sizes = [16, 8], strides = [1, 1]} : vector<16x32xf32> to vector<16x8xf32>
    %55 = arith.truncf %54 : vector<16x8xf32> to vector<16x8xbf16>
    %cst_27 = arith.constant dense<0.000000e+00> : vector<16x16xf32>
    %56 = tpu.matmul %51, %53, %cst_27 {dimension_numbers = #tpu.dot_dimension_numbers<[1], [1], [0], [0], [0, 0, 1, 0], [], []>} : vector<16x8xbf16>, vector<16x8xbf16>, vector<16x16xf32> -> vector<16x16xf32>
    %cst_28 = arith.constant 0.353553385 : f32
    %57 = vector.broadcast %cst_28 : f32 to vector<16x16xf32>
    %58 = arith.mulf %56, %57 : vector<16x16xf32>
    %59 = arith.addf %58, %49 : vector<16x16xf32>
    %cst_29 = arith.constant dense<0xFF800000> : vector<16xf32>
    %60 = vector.multi_reduction <maximumf>, %59, %cst_29 [1] : vector<16x16xf32> to vector<16xf32>
    %61 = vector.shape_cast %60 : vector<16xf32> to vector<16x1xf32>
    %62 = vector.broadcast %61 : vector<16x1xf32> to vector<16x16xf32>
    %63 = arith.subf %59, %62 : vector<16x16xf32>
    %64 = math.exp %63 : vector<16x16xf32>
    %cst_30 = arith.constant dense<0.000000e+00> : vector<16xf32>
    %65 = vector.multi_reduction <add>, %64, %cst_30 [1] : vector<16x16xf32> to vector<16xf32>
    %66 = vector.shape_cast %65 : vector<16xf32> to vector<16x1xf32>
    %67 = tpu.reciprocal %66 {approx = true} : vector<16x1xf32> -> vector<16x1xf32>
    %68 = vector.broadcast %67 : vector<16x1xf32> to vector<16x16xf32>
    %69 = arith.mulf %64, %68 : vector<16x16xf32>
    %70 = arith.truncf %69 : vector<16x16xf32> to vector<16x16xbf16>
    %cst_31 = arith.constant dense<0.000000e+00> : vector<16x8xf32>
    %71 = tpu.matmul %70, %55, %cst_31 {dimension_numbers = #tpu.dot_dimension_numbers<[1], [0], [0], [1], [0, 0, 1, 1], [], []>} : vector<16x16xbf16>, vector<16x8xbf16>, vector<16x8xf32> -> vector<16x8xf32>
    %72 = vector.extract_strided_slice %44 {offsets = [0, 8], sizes = [16, 8], strides = [1, 1]} : vector<16x32xf32> to vector<16x8xf32>
    %73 = arith.truncf %72 : vector<16x8xf32> to vector<16x8xbf16>
    %74 = vector.extract_strided_slice %48 {offsets = [0, 8], sizes = [16, 8], strides = [1, 1]} : vector<16x32xf32> to vector<16x8xf32>
    %75 = arith.truncf %74 : vector<16x8xf32> to vector<16x8xbf16>
    %76 = vector.extract_strided_slice %36 {offsets = [0, 8], sizes = [16, 8], strides = [1, 1]} : vector<16x32xf32> to vector<16x8xf32>
    %77 = arith.truncf %76 : vector<16x8xf32> to vector<16x8xbf16>
    %cst_32 = arith.constant dense<0.000000e+00> : vector<16x16xf32>
    %78 = tpu.matmul %73, %75, %cst_32 {dimension_numbers = #tpu.dot_dimension_numbers<[1], [1], [0], [0], [0, 0, 1, 0], [], []>} : vector<16x8xbf16>, vector<16x8xbf16>, vector<16x16xf32> -> vector<16x16xf32>
    %cst_33 = arith.constant 0.353553385 : f32
    %79 = vector.broadcast %cst_33 : f32 to vector<16x16xf32>
    %80 = arith.mulf %78, %79 : vector<16x16xf32>
    %81 = arith.addf %80, %49 : vector<16x16xf32>
    %cst_34 = arith.constant dense<0xFF800000> : vector<16xf32>
    %82 = vector.multi_reduction <maximumf>, %81, %cst_34 [1] : vector<16x16xf32> to vector<16xf32>
    %83 = vector.shape_cast %82 : vector<16xf32> to vector<16x1xf32>
    %84 = vector.broadcast %83 : vector<16x1xf32> to vector<16x16xf32>
    %85 = arith.subf %81, %84 : vector<16x16xf32>
    %86 = math.exp %85 : vector<16x16xf32>
    %cst_35 = arith.constant dense<0.000000e+00> : vector<16xf32>
    %87 = vector.multi_reduction <add>, %86, %cst_35 [1] : vector<16x16xf32> to vector<16xf32>
    %88 = vector.shape_cast %87 : vector<16xf32> to vector<16x1xf32>
    %89 = tpu.reciprocal %88 {approx = true} : vector<16x1xf32> -> vector<16x1xf32>
    %90 = vector.broadcast %89 : vector<16x1xf32> to vector<16x16xf32>
    %91 = arith.mulf %86, %90 : vector<16x16xf32>
    %92 = arith.truncf %91 : vector<16x16xf32> to vector<16x16xbf16>
    %cst_36 = arith.constant dense<0.000000e+00> : vector<16x8xf32>
    %93 = tpu.matmul %92, %77, %cst_36 {dimension_numbers = #tpu.dot_dimension_numbers<[1], [0], [0], [1], [0, 0, 1, 1], [], []>} : vector<16x16xbf16>, vector<16x8xbf16>, vector<16x8xf32> -> vector<16x8xf32>
    %94 = vector.extract_strided_slice %44 {offsets = [0, 16], sizes = [16, 8], strides = [1, 1]} : vector<16x32xf32> to vector<16x8xf32>
    %95 = arith.truncf %94 : vector<16x8xf32> to vector<16x8xbf16>
    %96 = vector.extract_strided_slice %48 {offsets = [0, 16], sizes = [16, 8], strides = [1, 1]} : vector<16x32xf32> to vector<16x8xf32>
    %97 = arith.truncf %96 : vector<16x8xf32> to vector<16x8xbf16>
    %98 = vector.extract_strided_slice %36 {offsets = [0, 16], sizes = [16, 8], strides = [1, 1]} : vector<16x32xf32> to vector<16x8xf32>
    %99 = arith.truncf %98 : vector<16x8xf32> to vector<16x8xbf16>
    %cst_37 = arith.constant dense<0.000000e+00> : vector<16x16xf32>
    %100 = tpu.matmul %95, %97, %cst_37 {dimension_numbers = #tpu.dot_dimension_numbers<[1], [1], [0], [0], [0, 0, 1, 0], [], []>} : vector<16x8xbf16>, vector<16x8xbf16>, vector<16x16xf32> -> vector<16x16xf32>
    %cst_38 = arith.constant 0.353553385 : f32
    %101 = vector.broadcast %cst_38 : f32 to vector<16x16xf32>
    %102 = arith.mulf %100, %101 : vector<16x16xf32>
    %103 = arith.addf %102, %49 : vector<16x16xf32>
    %cst_39 = arith.constant dense<0xFF800000> : vector<16xf32>
    %104 = vector.multi_reduction <maximumf>, %103, %cst_39 [1] : vector<16x16xf32> to vector<16xf32>
    %105 = vector.shape_cast %104 : vector<16xf32> to vector<16x1xf32>
    %106 = vector.broadcast %105 : vector<16x1xf32> to vector<16x16xf32>
    %107 = arith.subf %103, %106 : vector<16x16xf32>
    %108 = math.exp %107 : vector<16x16xf32>
    %cst_40 = arith.constant dense<0.000000e+00> : vector<16xf32>
    %109 = vector.multi_reduction <add>, %108, %cst_40 [1] : vector<16x16xf32> to vector<16xf32>
    %110 = vector.shape_cast %109 : vector<16xf32> to vector<16x1xf32>
    %111 = tpu.reciprocal %110 {approx = true} : vector<16x1xf32> -> vector<16x1xf32>
    %112 = vector.broadcast %111 : vector<16x1xf32> to vector<16x16xf32>
    %113 = arith.mulf %108, %112 : vector<16x16xf32>
    %114 = arith.truncf %113 : vector<16x16xf32> to vector<16x16xbf16>
    %cst_41 = arith.constant dense<0.000000e+00> : vector<16x8xf32>
    %115 = tpu.matmul %114, %99, %cst_41 {dimension_numbers = #tpu.dot_dimension_numbers<[1], [0], [0], [1], [0, 0, 1, 1], [], []>} : vector<16x16xbf16>, vector<16x8xbf16>, vector<16x8xf32> -> vector<16x8xf32>
    %116 = vector.extract_strided_slice %44 {offsets = [0, 24], sizes = [16, 8], strides = [1, 1]} : vector<16x32xf32> to vector<16x8xf32>
    %117 = arith.truncf %116 : vector<16x8xf32> to vector<16x8xbf16>
    %118 = vector.extract_strided_slice %48 {offsets = [0, 24], sizes = [16, 8], strides = [1, 1]} : vector<16x32xf32> to vector<16x8xf32>
    %119 = arith.truncf %118 : vector<16x8xf32> to vector<16x8xbf16>
    %120 = vector.extract_strided_slice %36 {offsets = [0, 24], sizes = [16, 8], strides = [1, 1]} : vector<16x32xf32> to vector<16x8xf32>
    %121 = arith.truncf %120 : vector<16x8xf32> to vector<16x8xbf16>
    %cst_42 = arith.constant dense<0.000000e+00> : vector<16x16xf32>
    %122 = tpu.matmul %117, %119, %cst_42 {dimension_numbers = #tpu.dot_dimension_numbers<[1], [1], [0], [0], [0, 0, 1, 0], [], []>} : vector<16x8xbf16>, vector<16x8xbf16>, vector<16x16xf32> -> vector<16x16xf32>
    %cst_43 = arith.constant 0.353553385 : f32
    %123 = vector.broadcast %cst_43 : f32 to vector<16x16xf32>
    %124 = arith.mulf %122, %123 : vector<16x16xf32>
    %125 = arith.addf %124, %49 : vector<16x16xf32>
    %cst_44 = arith.constant dense<0xFF800000> : vector<16xf32>
    %126 = vector.multi_reduction <maximumf>, %125, %cst_44 [1] : vector<16x16xf32> to vector<16xf32>
    %127 = vector.shape_cast %126 : vector<16xf32> to vector<16x1xf32>
    %128 = vector.broadcast %127 : vector<16x1xf32> to vector<16x16xf32>
    %129 = arith.subf %125, %128 : vector<16x16xf32>
    %130 = math.exp %129 : vector<16x16xf32>
    %cst_45 = arith.constant dense<0.000000e+00> : vector<16xf32>
    %131 = vector.multi_reduction <add>, %130, %cst_45 [1] : vector<16x16xf32> to vector<16xf32>
    %132 = vector.shape_cast %131 : vector<16xf32> to vector<16x1xf32>
    %133 = tpu.reciprocal %132 {approx = true} : vector<16x1xf32> -> vector<16x1xf32>
    %134 = vector.broadcast %133 : vector<16x1xf32> to vector<16x16xf32>
    %135 = arith.mulf %130, %134 : vector<16x16xf32>
    %136 = arith.truncf %135 : vector<16x16xf32> to vector<16x16xbf16>
    %cst_46 = arith.constant dense<0.000000e+00> : vector<16x8xf32>
    %137 = tpu.matmul %136, %121, %cst_46 {dimension_numbers = #tpu.dot_dimension_numbers<[1], [0], [0], [1], [0, 0, 1, 1], [], []>} : vector<16x16xbf16>, vector<16x8xbf16>, vector<16x8xf32> -> vector<16x8xf32>
    %138 = tpu.concatenate %71, %93, %115, %137 in 1 : vector<16x8xf32>, vector<16x8xf32>, vector<16x8xf32>, vector<16x8xf32> -> vector<16x32xf32>
    %c1_47 = arith.constant 1 : index
    %c0_48 = arith.constant 0 : index
    %c0_49 = arith.constant 0 : index
    %139 = vector.load %arg4[%c1_47, %c0_48, %c0_49] : memref<2x32x32xf32, #tpu.memory_space<vmem>>, vector<1x32x32xf32>
    %140 = vector.shape_cast %139 : vector<1x32x32xf32> to vector<32x32xf32>
    %cst_50 = arith.constant dense<0.000000e+00> : vector<16x32xf32>
    %141 = tpu.matmul %138, %140, %cst_50 {dimension_numbers = #tpu.dot_dimension_numbers<[1], [0], [0], [1], [0, 0, 1, 1], [], []>} : vector<16x32xf32>, vector<32x32xf32>, vector<16x32xf32> -> vector<16x32xf32>
    %142 = arith.addf %0, %141 : vector<16x32xf32>
    %143 = vector.broadcast %5 : vector<1x32xf32> to vector<16x32xf32>
    %144 = arith.addf %142, %143 : vector<16x32xf32>
    %cst_51 = arith.constant dense<0.000000e+00> : vector<16xf32>
    %145 = vector.multi_reduction <add>, %144, %cst_51 [1] : vector<16x32xf32> to vector<16xf32>
    %146 = vector.shape_cast %145 : vector<16xf32> to vector<16x1xf32>
    %cst_52 = arith.constant 3.200000e+01 : f32
    %147 = vector.broadcast %cst_52 : f32 to vector<16x1xf32>
    %148 = arith.divf %146, %147 : vector<16x1xf32>
    %149 = vector.broadcast %148 : vector<16x1xf32> to vector<16x32xf32>
    %150 = arith.subf %144, %149 : vector<16x32xf32>
    %151 = arith.mulf %150, %150 : vector<16x32xf32>
    %cst_53 = arith.constant dense<0.000000e+00> : vector<16xf32>
    %152 = vector.multi_reduction <add>, %151, %cst_53 [1] : vector<16x32xf32> to vector<16xf32>
    %153 = vector.shape_cast %152 : vector<16xf32> to vector<16x1xf32>
    %cst_54 = arith.constant 3.200000e+01 : f32
    %154 = vector.broadcast %cst_54 : f32 to vector<16x1xf32>
    %155 = arith.divf %153, %154 : vector<16x1xf32>
    %156 = vector.broadcast %148 : vector<16x1xf32> to vector<16x32xf32>
    %157 = arith.subf %144, %156 : vector<16x32xf32>
    %cst_55 = arith.constant 9.99999974E-6 : f32
    %158 = vector.broadcast %cst_55 : f32 to vector<16x1xf32>
    %159 = arith.addf %155, %158 : vector<16x1xf32>
    %160 = math.rsqrt %159 : vector<16x1xf32>
    %161 = vector.broadcast %160 : vector<16x1xf32> to vector<16x32xf32>
    %162 = arith.mulf %157, %161 : vector<16x32xf32>
    %163 = vector.broadcast %3 : vector<1x32xf32> to vector<16x32xf32>
    %164 = arith.mulf %162, %163 : vector<16x32xf32>
    %165 = vector.broadcast %4 : vector<1x32xf32> to vector<16x32xf32>
    %166 = arith.addf %164, %165 : vector<16x32xf32>
    %c0_56 = arith.constant 0 : index
    %c0_57 = arith.constant 0 : index
    %167 = vector.load %arg5[%c0_56, %c0_57] : memref<32x256xf32, #tpu.memory_space<vmem>>, vector<32x256xf32>
    %cst_58 = arith.constant dense<0.000000e+00> : vector<16x256xf32>
    %168 = tpu.matmul %166, %167, %cst_58 {dimension_numbers = #tpu.dot_dimension_numbers<[1], [0], [0], [1], [0, 0, 1, 1], [], []>} : vector<16x32xf32>, vector<32x256xf32>, vector<16x256xf32> -> vector<16x256xf32>
    %c0_59 = arith.constant 0 : index
    %c0_60 = arith.constant 0 : index
    %169 = vector.load %arg6[%c0_59, %c0_60] : memref<1x256xf32, #tpu.memory_space<vmem>>, vector<1x256xf32>
    %170 = vector.broadcast %169 : vector<1x256xf32> to vector<16x256xf32>
    %171 = arith.addf %168, %170 : vector<16x256xf32>
    %172 = vector.extract_strided_slice %171 {offsets = [0, 0], sizes = [16, 128], strides = [1, 1]} : vector<16x256xf32> to vector<16x128xf32>
    %173 = vector.extract_strided_slice %171 {offsets = [0, 128], sizes = [16, 128], strides = [1, 1]} : vector<16x256xf32> to vector<16x128xf32>
    %cst_61 = arith.constant 5.000000e-01 : f32
    %174 = vector.broadcast %cst_61 : f32 to vector<16x128xf32>
    %175 = arith.mulf %174, %172 : vector<16x128xf32>
    %cst_62 = arith.constant 4.471500e-02 : f32
    %176 = vector.broadcast %cst_62 : f32 to vector<16x128xf32>
    %177 = arith.mulf %176, %172 : vector<16x128xf32>
    %178 = arith.mulf %177, %172 : vector<16x128xf32>
    %179 = arith.mulf %178, %172 : vector<16x128xf32>
    %180 = arith.addf %172, %179 : vector<16x128xf32>
    %cst_63 = arith.constant 0.797884583 : f32
    %181 = vector.broadcast %cst_63 : f32 to vector<16x128xf32>
    %182 = arith.mulf %181, %180 : vector<16x128xf32>
    %183 = math.tanh %182 : vector<16x128xf32>
    %cst_64 = arith.constant 1.000000e+00 : f32
    %184 = vector.broadcast %cst_64 : f32 to vector<16x128xf32>
    %185 = arith.addf %184, %183 : vector<16x128xf32>
    %186 = arith.mulf %175, %185 : vector<16x128xf32>
    %187 = arith.mulf %186, %173 : vector<16x128xf32>
    %c0_65 = arith.constant 0 : index
    %c0_66 = arith.constant 0 : index
    %188 = vector.load %arg7[%c0_65, %c0_66] : memref<128x32xf32, #tpu.memory_space<vmem>>, vector<128x32xf32>
    %cst_67 = arith.constant dense<0.000000e+00> : vector<16x32xf32>
    %189 = tpu.matmul %187, %188, %cst_67 {dimension_numbers = #tpu.dot_dimension_numbers<[1], [0], [0], [1], [0, 0, 1, 1], [], []>} : vector<16x128xf32>, vector<128x32xf32>, vector<16x32xf32> -> vector<16x32xf32>
    %190 = arith.addf %144, %189 : vector<16x32xf32>
    %191 = vector.broadcast %6 : vector<1x32xf32> to vector<16x32xf32>
    %192 = arith.addf %190, %191 : vector<16x32xf32>
    %c0_68 = arith.constant 0 : index
    %c0_69 = arith.constant 0 : index
    %193 = vector.load %arg11[%c0_68, %c0_69] : memref<16x32xf32, #tpu.memory_space<vmem>>, vector<16x32xf32>
    tpu.vector_store %arg11[%c0_68, %c0_69], %192 {strides = array<i32>} : memref<16x32xf32, #tpu.memory_space<vmem>>, vector<16x32xf32>,
    return
  }
  func.func @transform_0(%arg0: i32) -> (i32, i32) {
    %c0_i32 = arith.constant 0 : i32
    %c0_i32_0 = arith.constant 0 : i32
    return %arg0, %c0_i32 : i32, i32
  }
  func.func @transform_1(%arg0: i32) -> (i32, i32) {
    %c0_i32 = arith.constant 0 : i32
    %c0_i32_0 = arith.constant 0 : i32
    %c0_i32_1 = arith.constant 0 : i32
    return %c0_i32, %c0_i32_0 : i32, i32
  }
  func.func @transform_2(%arg0: i32) -> (i32, i32) {
    %c0_i32 = arith.constant 0 : i32
    %c0_i32_0 = arith.constant 0 : i32
    %c0_i32_1 = arith.constant 0 : i32
    return %c0_i32, %c0_i32_0 : i32, i32
  }
  func.func @transform_3(%arg0: i32) -> (i32, i32, i32) {
    %c0_i32 = arith.constant 0 : i32
    %c0_i32_0 = arith.constant 0 : i32
    %c0_i32_1 = arith.constant 0 : i32
    %c0_i32_2 = arith.constant 0 : i32
    return %c0_i32, %c0_i32_0, %c0_i32_1 : i32, i32, i32
  }
  func.func @transform_4(%arg0: i32) -> (i32, i32) {
    %c0_i32 = arith.constant 0 : i32
    %c0_i32_0 = arith.constant 0 : i32
    %c0_i32_1 = arith.constant 0 : i32
    return %c0_i32, %c0_i32_0 : i32, i32
  }
  func.func @transform_5(%arg0: i32) -> (i32, i32) {
    %c0_i32 = arith.constant 0 : i32
    %c0_i32_0 = arith.constant 0 : i32
    %c0_i32_1 = arith.constant 0 : i32
    return %c0_i32, %c0_i32_0 : i32, i32
  }
  func.func @transform_6(%arg0: i32) -> (i32, i32) {
    %c0_i32 = arith.constant 0 : i32
    %c0_i32_0 = arith.constant 0 : i32
    %c0_i32_1 = arith.constant 0 : i32
    return %c0_i32, %c0_i32_0 : i32, i32
  }
  func.func @transform_7(%arg0: i32) -> (i32, i32) {
    %c0_i32 = arith.constant 0 : i32
    %c0_i32_0 = arith.constant 0 : i32
    %c0_i32_1 = arith.constant 0 : i32
    return %c0_i32, %c0_i32_0 : i32, i32
  }
  func.func @transform_8(%arg0: i32) -> (i32, i32) {
    %c0_i32 = arith.constant 0 : i32
    %c0_i32_0 = arith.constant 0 : i32
    %c0_i32_1 = arith.constant 0 : i32
    return %c0_i32, %c0_i32_0 : i32, i32
  }
  func.func @transform_9(%arg0: i32) -> (i32, i32) {
    %c0_i32 = arith.constant 0 : i32
    %c0_i32_0 = arith.constant 0 : i32
    %c0_i32_1 = arith.constant 0 : i32
    return %c0_i32, %c0_i32_0 : i32, i32
  }
  func.func @transform_10(%arg0: i32) -> (i32, i32) {
    %c0_i32 = arith.constant 0 : i32
    %c0_i32_0 = arith.constant 0 : i32
    return %arg0, %c0_i32 : i32, i32
  }
}

</mosaic_0001>

<llo_original>
// kernel: tpu_custom_call.1
$region0: #{tpu_custom_call.1}
  #allocation0 [shape = 'u32[]', space=smem, size = 0x4, offset = 0x4, fixed_abs, tag = 'smem constant byte address 0x4 - core index']
  #allocation1 [shape = 'u32[144,128]{1,0:T(1,128)}', space=vmem, size = 0x12000, scoped, tag = 'internal scratch']
  %s0 = inlined_call_operand.hbm [shape: f32[16,32], index: 0, kind: input, shape index: {}]
  %s1 = inlined_call_operand.vmem [shape: f32[32,96], index: 1, kind: input, shape index: {}]
  %s2 = inlined_call_operand.hbm [shape: f32[1,96], index: 2, kind: input, shape index: {}]
  %s3 = inlined_call_operand.vmem [shape: f32[2,32,32], index: 3, kind: input, shape index: {}]
  %s4 = inlined_call_operand.vmem [shape: f32[32,256], index: 4, kind: input, shape index: {}]
  %s5 = inlined_call_operand.vmem [shape: f32[1,256], index: 5, kind: input, shape index: {}]
  %s6 = inlined_call_operand.vmem [shape: f32[128,32], index: 6, kind: input, shape index: {}]
  %s7 = inlined_call_operand.hbm [shape: f32[8,32], index: 7, kind: input, shape index: {}]
  %s8 = inlined_call_operand.vmem [shape: f32[16,64], index: 8, kind: input, shape index: {}]
  %s9 = inlined_call_operand.vmem [shape: f32[16,16], index: 9, kind: input, shape index: {}]
  %s10 = inlined_call_operand.hbm [shape: f32[16,32], index: 10, kind: output, shape index: {}]
  %s11 = sld [smem:[#allocation0]]
  $region62: #{tpu_custom_call.1} parent=0
    _
  %s13 = ssub.s32 1, %s11
  %s14 = scalar_select 0, %s13, %s11
  $region1: #{tpu_custom_call.1} parent=0
    #allocation2 [shape = 'u8[8192]{0}', space=vmem, size = 0x2000, scoped, tag = 'input window, operand 0, single buffered']
    #allocation3 [shape = 's32[1]{0}', space=sflag, size = 0x4, scoped, tag = 'scoped memory for tpu_custom_call.1']
    #allocation4 [shape = 's32[1]{0}', space=sflag, size = 0x4, scoped, tag = 'scoped memory for tpu_custom_call.1']
    #allocation5 [shape = 'u8[512]{0}', space=vmem, size = 0x400, scoped, tag = 'input window, operand 2, single buffered']
    #allocation6 [shape = 's32[1]{0}', space=sflag, size = 0x4, scoped, tag = 'scoped memory for tpu_custom_call.1']
    #allocation7 [shape = 'u8[4096]{0}', space=vmem, size = 0x1000, scoped, tag = 'input window, operand 7, single buffered']
    #allocation8 [shape = 'u8[8192]{0}', space=vmem, size = 0x2000, scoped, tag = 'output window, operand 0, single buffered']
    %15 = vsyncpa [#allocation3], 0
    %16 = vsyncpa [#allocation6], 0
    %17 = vsyncpa [#allocation4], 0
    // Predicated region
    $region2: #{tpu_custom_call.1} parent=1 // pred_check
      _
    $region3: #{tpu_custom_call.1} parent=1 // pred_check_branch
      %19 = sbr.rel (0) target = $region5
    $region4: #{tpu_custom_call.1} parent=1 // pred_region
      %s21 = ssub.s32 256, 256
      %22 = vsyncadd [#allocation3], %s21
      %s23 = sshll.u32 [#allocation2], 4
      %s24 = int_to_ptr.vmem [resolvable:$true] %s23
      %29 = dma.hbm_to_vmem [thread:$0]  %s0, 256, %s24, [#allocation3], 128, 128, 8
    $region5: #{tpu_custom_call.1} parent=1 // pred_fallthru
      _
    // Predicated region
    $region6: #{tpu_custom_call.1} parent=1 // pred_check
      _
    $region7: #{tpu_custom_call.1} parent=1 // pred_check_branch
      %31 = sbr.rel (0) target = $region9
    $region8: #{tpu_custom_call.1} parent=1 // pred_region
      _
    $region9: #{tpu_custom_call.1} parent=1 // pred_fallthru
      _
    // Predicated region
    $region10: #{tpu_custom_call.1} parent=1 // pred_check
      _
    $region11: #{tpu_custom_call.1} parent=1 // pred_check_branch
      %33 = sbr.rel (0) target = $region13
    $region12: #{tpu_custom_call.1} parent=1 // pred_region
      %s35 = ssub.s32 16, 16
      %36 = vsyncadd [#allocation6], %s35
      %s38 = sshll.u32 [#allocation5], 4
      %s39 = int_to_ptr.vmem [resolvable:$true] %s38
      %41 = dma.hbm_to_vmem [thread:$0]  %s2, 16, %s39, [#allocation6]
    $region13: #{tpu_custom_call.1} parent=1 // pred_fallthru
      _
    // Predicated region
    $region14: #{tpu_custom_call.1} parent=1 // pred_check
      _
    $region15: #{tpu_custom_call.1} parent=1 // pred_check_branch
      %43 = sbr.rel (0) target = $region17
    $region16: #{tpu_custom_call.1} parent=1 // pred_region
      _
    $region17: #{tpu_custom_call.1} parent=1 // pred_fallthru
      _
    // Predicated region
    $region18: #{tpu_custom_call.1} parent=1 // pred_check
      _
    $region19: #{tpu_custom_call.1} parent=1 // pred_check_branch
      %45 = sbr.rel (0) target = $region21
    $region20: #{tpu_custom_call.1} parent=1 // pred_region
      _
    $region21: #{tpu_custom_call.1} parent=1 // pred_fallthru
      _
    // Predicated region
    $region22: #{tpu_custom_call.1} parent=1 // pred_check
      _
    $region23: #{tpu_custom_call.1} parent=1 // pred_check_branch
      %47 = sbr.rel (0) target = $region25
    $region24: #{tpu_custom_call.1} parent=1 // pred_region
      _
    $region25: #{tpu_custom_call.1} parent=1 // pred_fallthru
      _
    // Predicated region
    $region26: #{tpu_custom_call.1} parent=1 // pred_check
      _
    $region27: #{tpu_custom_call.1} parent=1 // pred_check_branch
      %49 = sbr.rel (0) target = $region29
    $region28: #{tpu_custom_call.1} parent=1 // pred_region
      _
    $region29: #{tpu_custom_call.1} parent=1 // pred_fallthru
      _
    // Predicated region
    $region30: #{tpu_custom_call.1} parent=1 // pred_check
      _
    $region31: #{tpu_custom_call.1} parent=1 // pred_check_branch
      %51 = sbr.rel (0) target = $region33
    $region32: #{tpu_custom_call.1} parent=1 // pred_region
      %s53 = ssub.s32 128, 128
      %54 = vsyncadd [#allocation6], %s53
      %s56 = sshll.u32 [#allocation7], 4
      %s57 = int_to_ptr.vmem [resolvable:$true] %s56
      %59 = dma.hbm_to_vmem [thread:$0]  %s7, 128, %s57, [#allocation6]
    $region33: #{tpu_custom_call.1} parent=1 // pred_fallthru
      _
    // Predicated region
    $region34: #{tpu_custom_call.1} parent=1 // pred_check
      _
    $region35: #{tpu_custom_call.1} parent=1 // pred_check_branch
      %61 = sbr.rel (0) target = $region37
    $region36: #{tpu_custom_call.1} parent=1 // pred_region
      _
    $region37: #{tpu_custom_call.1} parent=1 // pred_fallthru
      _
    // Predicated region
    $region38: #{tpu_custom_call.1} parent=1 // pred_check
      _
    $region39: #{tpu_custom_call.1} parent=1 // pred_check_branch
      %63 = sbr.rel (0) target = $region41
    $region40: #{tpu_custom_call.1} parent=1 // pred_region
      _
    $region41: #{tpu_custom_call.1} parent=1 // pred_fallthru
      _
    // Predicated region
    $region42: #{tpu_custom_call.1} parent=1 // pred_check
      _
    $region43: #{tpu_custom_call.1} parent=1 // pred_check_branch
      %65 = sbr.rel (0) target = $region45
    $region44: #{tpu_custom_call.1} parent=1 // pred_region
      %66 = dma.done [#allocation3], 256
    $region45: #{tpu_custom_call.1} parent=1 // pred_fallthru
      _
    // Predicated region
    $region46: #{tpu_custom_call.1} parent=1 // pred_check
      _
    $region47: #{tpu_custom_call.1} parent=1 // pred_check_branch
      %68 = sbr.rel (0) target = $region49
    $region48: #{tpu_custom_call.1} parent=1 // pred_region
      %69 = dma.done [#allocation6], 16
    $region49: #{tpu_custom_call.1} parent=1 // pred_fallthru
      _
    // Predicated region
    $region50: #{tpu_custom_call.1} parent=1 // pred_check
      _
    $region51: #{tpu_custom_call.1} parent=1 // pred_check_branch
      %71 = sbr.rel (0) target = $region53
    $region52: #{tpu_custom_call.1} parent=1 // pred_region
      %72 = dma.done [#allocation6], 128
    $region53: #{tpu_custom_call.1} parent=1 // pred_fallthru
      _
    %v74 = vld [vmem:[#allocation2] sm:$0xff]
    %v75 = vld [vmem:[#allocation2 + $0x8] sm:$0xff]
    %v76 = vld [vmem:[#allocation7] sm:$0x1]
    %v77 = vld [vmem:[#allocation7 + $0x1] sm:$0x1]
    %v78 = vld [vmem:[#allocation7 + $0x2] sm:$0x1]
    %v79 = vld [vmem:[#allocation7 + $0x3] sm:$0x1]
    %v80 = vld [vmem:[#allocation7 + $0x4] sm:$0x1]
    %v81 = vld [vmem:[#allocation7 + $0x5] sm:$0x1]
    %vm82 = vcmask 261120
    %v83 = vsel %vm82, %v74, 0.0
    %84 = vadd.xlane.f32.xlu0 %v83
    %v85 = vpop.xlane.xlu0 %84
    %v86 = vsel %vm82, %v75, 0.0
    %87 = vadd.xlane.f32.xlu0 %v86
    %v88 = vpop.xlane.xlu0 %87
    %v89 = vrcp.pop 32.0
    %v90 = vmul.f32 %v85, %v89
    %v91 = vmul.f32 %v88, %v89
    %v92 = vsub.f32 %v74, %v90
    %v93 = vsub.f32 %v75, %v91
    %v94 = vmul.f32 %v92, %v92
    %v95 = vmul.f32 %v93, %v93
    %v96 = vsel %vm82, %v94, 0.0
    %97 = vadd.xlane.f32.xlu0 %v96
    %v98 = vpop.xlane.xlu0 %97
    %v99 = vsel %vm82, %v95, 0.0
    %100 = vadd.xlane.f32.xlu0 %v99
    %v101 = vpop.xlane.xlu0 %100
    %v102 = vmul.f32 %v98, %v89
    %v103 = vmul.f32 %v101, %v89
    %v104 = vadd.f32 %v102, 1e-05
    %v105 = vadd.f32 %v103, 1e-05
    %v106 = vrsqrt.pop %v104
    %v107 = vrsqrt.pop %v105
    %v108 = vmul.f32 %v92, %v106
    %v109 = vmul.f32 %v93, %v107
    %v110 = vlaneseq
    %v111 = vshrl.u32 %v110, 7
    %v112 = vsub.s32 0, %v111
    %v113 = vrot.slane %v76, %v112
    %v114 = vmul.f32 %v108, %v113
    %v115 = vmul.f32 %v109, %v113
    %v116 = vlaneseq
    %v117 = vshrl.u32 %v116, 7
    %v118 = vsub.s32 0, %v117
    %v119 = vrot.slane %v77, %v118
    %v120 = vadd.f32 %v114, %v119
    %v121 = vadd.f32 %v115, %v119
    %v122 = vld [vmem:[%s1] sm:$0xff]
    %v123 = vld [vmem:[%s1 + $0x8] sm:$0xff]
    %v124 = vld [vmem:[%s1 + $0x10] sm:$0xff]
    %v125 = vld [vmem:[%s1 + $0x18] sm:$0xff]
    %v126 = vld [vmem:[#allocation5] sm:$0x1]
    %v128 = vlaneseq
    %v129 = vshrl.u32 %v128, 7
    %v130 = vsub.s32 0, %v129
    %v131 = vrot.slane %v126, %v130
    %v134 = vsel %vm82, %v120, 0
    %v137 = vsel %vm82, %v121, 0
    %139 = vmatprep.subr.mxu0 0.0
    %140 = vmatpush1.msra.mxu0 %v122
    %141 = vmatprep.subr.mxu0 0.0
    %142 = vmatpush1.msra.mxu0 %v123
    %143 = vmatprep.subr.mxu0 0.0
    %144 = vmatpush1.msra.mxu0 %v124
    %145 = vmatprep.subr.mxu0 0.0
    %146 = vmatpush1.msra.mxu0 %v125
    %147 = vmatprep.subr.mxu0 0.0
    %148 = vmatpush1.msra.mxu0 0.0
    %149 = vmatprep.subr.mxu0 0.0
    %150 = vmatpush1.msra.mxu0 0.0
    %151 = vmatprep.subr.mxu0 0.0
    %152 = vmatpush1.msra.mxu0 0.0
    %153 = vmatprep.subr.mxu0 0.0
    %154 = vmatpush1.msra.mxu0 0.0
    %155 = vmatprep.subr.mxu0 0.0
    %156 = vmatpush1.msra.mxu0 0.0
    %157 = vmatprep.subr.mxu0 0.0
    %158 = vmatpush1.msra.mxu0 0.0
    %159 = vmatprep.subr.mxu0 0.0
    %160 = vmatpush1.msra.mxu0 0.0
    %161 = vmatprep.subr.mxu0 0.0
    %162 = vmatpush1.msra.mxu0 0.0
    %163 = vmatprep.subr.mxu0 0.0
    %164 = vmatpush1.msra.mxu0 0.0
    %165 = vmatprep.subr.mxu0 0.0
    %166 = vmatpush1.msra.mxu0 0.0
    %167 = vmatprep.subr.mxu0 0.0
    %168 = vmatpush1.msra.mxu0 0.0
    %169 = vmatprep.subr.mxu0 0.0
    %170 = vmatpush1.msra.mxu0 0.0
    %171 = vmatprep.subr.mxu0 0.0
    %172 = vmatpush1.msra.mxu0 0.0
    %173 = vmatprep.subr.mxu0 0.0
    %174 = vmatpush1.msra.mxu0 0.0
    %175 = vmatprep.subr.mxu0 0.0
    %176 = vmatpush1.msra.mxu0 0.0
    %177 = vmatprep.subr.mxu0 0.0
    %178 = vmatpush1.msra.mxu0 0.0
    %179 = vmatprep.subr.mxu0 0.0
    %180 = vmatpush1.msra.mxu0 0.0
    %181 = vmatprep.subr.mxu0 0.0
    %182 = vmatpush1.msra.mxu0 0.0
    %183 = vmatprep.subr.mxu0 0.0
    %184 = vmatpush1.msra.mxu0 0.0
    %185 = vmatprep.subr.mxu0 0.0
    %186 = vmatpush1.msra.mxu0 0.0
    %187 = vmatprep.subr.mxu0 0.0
    %188 = vmatpush1.msra.mxu0 0.0
    %189 = vmatprep.subr.mxu0 0.0
    %190 = vmatpush1.msra.mxu0 0.0
    %191 = vmatprep.subr.mxu0 0.0
    %192 = vmatpush1.msra.mxu0 0.0
    %193 = vmatprep.subr.mxu0 0.0
    %194 = vmatpush1.msra.mxu0 0.0
    %195 = vmatprep.subr.mxu0 0.0
    %196 = vmatpush1.msra.mxu0 0.0
    %197 = vmatprep.subr.mxu0 0.0
    %198 = vmatpush1.msra.mxu0 0.0
    %199 = vmatprep.subr.mxu0 0.0
    %200 = vmatpush1.msra.mxu0 0.0
    %201 = vmatprep.subr.mxu0 0.0
    %202 = vmatpush1.msra.mxu0 0.0
    %203 = vmatprep.mubr.f32.mxu0 0.0
    %204 = vmatmul.mubr.f32.gmra.mrb[0].mxu0 %v134
    %v205 = vpop.f32.mrb[0].mxu0
    %v206 = vadd.f32 %v131, %v205
    %v207 = vpop.f32.mrb[0].mxu0
    %208 = vmatprep.mubr.f32.mxu0 0.0
    %209 = vmatmul.mubr.f32.gmra.mrb[0].mxu0 %v137
    %v210 = vpop.f32.mrb[0].mxu0
    %v211 = vadd.f32 %v131, %v210
    %v212 = vpop.f32.mrb[0].mxu0
    %213 = vdwg.mxu0
    %v214 = vld [vmem:[%s8] sm:$0xff]
    %v215 = vld [vmem:[%s8 + $0x8] sm:$0xff]
    %v216 = vld [vmem:[%s3] sm:$0xff]
    %v217 = vld [vmem:[%s3 + $0x8] sm:$0xff]
    %v218 = vld [vmem:[%s3 + $0x10] sm:$0xff]
    %v219 = vld [vmem:[%s3 + $0x18] sm:$0xff]
    %v220 = vmul.f32 %v206, %v214
    %v221 = vmul.f32 %v211, %v215
    %v223 = vsel %vm82, %v206, 0
    %v226 = vsel %vm82, %v211, 0
    %228 = vmatprep.subr.mxu0 0.0
    %229 = vmatpush1.msra.mxu0 %v216
    %230 = vmatprep.subr.mxu0 0.0
    %231 = vmatpush1.msra.mxu0 %v217
    %232 = vmatprep.subr.mxu0 0.0
    %233 = vmatpush1.msra.mxu0 %v218
    %234 = vmatprep.subr.mxu0 0.0
    %235 = vmatpush1.msra.mxu0 %v219
    %236 = vmatprep.subr.mxu0 0.0
    %237 = vmatpush1.msra.mxu0 0.0
    %238 = vmatprep.subr.mxu0 0.0
    %239 = vmatpush1.msra.mxu0 0.0
    %240 = vmatprep.subr.mxu0 0.0
    %241 = vmatpush1.msra.mxu0 0.0
    %242 = vmatprep.subr.mxu0 0.0
    %243 = vmatpush1.msra.mxu0 0.0
    %244 = vmatprep.subr.mxu0 0.0
    %245 = vmatpush1.msra.mxu0 0.0
    %246 = vmatprep.subr.mxu0 0.0
    %247 = vmatpush1.msra.mxu0 0.0
    %248 = vmatprep.subr.mxu0 0.0
    %249 = vmatpush1.msra.mxu0 0.0
    %250 = vmatprep.subr.mxu0 0.0
    %251 = vmatpush1.msra.mxu0 0.0
    %252 = vmatprep.subr.mxu0 0.0
    %253 = vmatpush1.msra.mxu0 0.0
    %254 = vmatprep.subr.mxu0 0.0
    %255 = vmatpush1.msra.mxu0 0.0
    %256 = vmatprep.subr.mxu0 0.0
    %257 = vmatpush1.msra.mxu0 0.0
    %258 = vmatprep.subr.mxu0 0.0
    %259 = vmatpush1.msra.mxu0 0.0
    %260 = vmatprep.subr.mxu0 0.0
    %261 = vmatpush1.msra.mxu0 0.0
    %262 = vmatprep.subr.mxu0 0.0
    %263 = vmatpush1.msra.mxu0 0.0
    %264 = vmatprep.subr.mxu0 0.0
    %265 = vmatpush1.msra.mxu0 0.0
    %266 = vmatprep.subr.mxu0 0.0
    %267 = vmatpush1.msra.mxu0 0.0
    %268 = vmatprep.subr.mxu0 0.0
    %269 = vmatpush1.msra.mxu0 0.0
    %270 = vmatprep.subr.mxu0 0.0
    %271 = vmatpush1.msra.mxu0 0.0
    %272 = vmatprep.subr.mxu0 0.0
    %273 = vmatpush1.msra.mxu0 0.0
    %274 = vmatprep.subr.mxu0 0.0
    %275 = vmatpush1.msra.mxu0 0.0
    %276 = vmatprep.subr.mxu0 0.0
    %277 = vmatpush1.msra.mxu0 0.0
    %278 = vmatprep.subr.mxu0 0.0
    %279 = vmatpush1.msra.mxu0 0.0
    %280 = vmatprep.subr.mxu0 0.0
    %281 = vmatpush1.msra.mxu0 0.0
    %282 = vmatprep.subr.mxu0 0.0
    %283 = vmatpush1.msra.mxu0 0.0
    %284 = vmatprep.subr.mxu0 0.0
    %285 = vmatpush1.msra.mxu0 0.0
    %286 = vmatprep.subr.mxu0 0.0
    %287 = vmatpush1.msra.mxu0 0.0
    %288 = vmatprep.subr.mxu0 0.0
    %289 = vmatpush1.msra.mxu0 0.0
    %290 = vmatprep.subr.mxu0 0.0
    %291 = vmatpush1.msra.mxu0 0.0
    %292 = vmatprep.mubr.f32.mxu0 0.0
    %293 = vmatmul.mubr.f32.gmra.mrb[0].mxu0 %v223
    %v294 = vpop.f32.mrb[0].mxu0
    %v295 = vadd.f32 0.0, %v294
    %v296 = vpop.f32.mrb[0].mxu0
    %297 = vmatprep.mubr.f32.mxu0 0.0
    %298 = vmatmul.mubr.f32.gmra.mrb[0].mxu0 %v226
    %v299 = vpop.f32.mrb[0].mxu0
    %v300 = vadd.f32 0.0, %v299
    %v301 = vpop.f32.mrb[0].mxu0
    %302 = vdwg.mxu0
    %305 = vrot.lane.b32.xlu0 %v214, 96
    %v306 = vpop.permute.xlu0 %305
    %307 = vrot.lane.b32.xlu0 %v215, 96
    %v308 = vpop.permute.xlu0 %307
    %v311 = vmul.f32 %v295, %v306
    %v312 = vmul.f32 %v300, %v308
    %v313 = vadd.f32 %v220, %v311
    %v314 = vadd.f32 %v221, %v312
    %315 = vrot.lane.b32.xlu0 %v214, 32
    %v316 = vpop.permute.xlu0 %315
    %317 = vrot.lane.b32.xlu0 %v215, 32
    %v318 = vpop.permute.xlu0 %317
    %v321 = vmul.f32 %v206, %v316
    %v322 = vmul.f32 %v211, %v318
    %323 = vrot.lane.b32.xlu0 %v206, 96
    %v324 = vpop.permute.xlu0 %323
    %325 = vrot.lane.b32.xlu0 %v211, 96
    %v326 = vpop.permute.xlu0 %325
    %v327 = vsel %vm82, %v324, 0
    %v329 = vsel %vm82, %v326, 0
    %331 = vmatprep.subr.mxu0 0.0
    %332 = vmatpush1.msra.mxu0 %v216
    %333 = vmatprep.subr.mxu0 0.0
    %334 = vmatpush1.msra.mxu0 %v217
    %335 = vmatprep.subr.mxu0 0.0
    %336 = vmatpush1.msra.mxu0 %v218
    %337 = vmatprep.subr.mxu0 0.0
    %338 = vmatpush1.msra.mxu0 %v219
    %339 = vmatprep.subr.mxu0 0.0
    %340 = vmatpush1.msra.mxu0 0.0
    %341 = vmatprep.subr.mxu0 0.0
    %342 = vmatpush1.msra.mxu0 0.0
    %343 = vmatprep.subr.mxu0 0.0
    %344 = vmatpush1.msra.mxu0 0.0
    %345 = vmatprep.subr.mxu0 0.0
    %346 = vmatpush1.msra.mxu0 0.0
    %347 = vmatprep.subr.mxu0 0.0
    %348 = vmatpush1.msra.mxu0 0.0
    %349 = vmatprep.subr.mxu0 0.0
    %350 = vmatpush1.msra.mxu0 0.0
    %351 = vmatprep.subr.mxu0 0.0
    %352 = vmatpush1.msra.mxu0 0.0
    %353 = vmatprep.subr.mxu0 0.0
    %354 = vmatpush1.msra.mxu0 0.0
    %355 = vmatprep.subr.mxu0 0.0
    %356 = vmatpush1.msra.mxu0 0.0
    %357 = vmatprep.subr.mxu0 0.0
    %358 = vmatpush1.msra.mxu0 0.0
    %359 = vmatprep.subr.mxu0 0.0
    %360 = vmatpush1.msra.mxu0 0.0
    %361 = vmatprep.subr.mxu0 0.0
    %362 = vmatpush1.msra.mxu0 0.0
    %363 = vmatprep.subr.mxu0 0.0
    %364 = vmatpush1.msra.mxu0 0.0
    %365 = vmatprep.subr.mxu0 0.0
    %366 = vmatpush1.msra.mxu0 0.0
    %367 = vmatprep.subr.mxu0 0.0
    %368 = vmatpush1.msra.mxu0 0.0
    %369 = vmatprep.subr.mxu0 0.0
    %370 = vmatpush1.msra.mxu0 0.0
    %371 = vmatprep.subr.mxu0 0.0
    %372 = vmatpush1.msra.mxu0 0.0
    %373 = vmatprep.subr.mxu0 0.0
    %374 = vmatpush1.msra.mxu0 0.0
    %375 = vmatprep.subr.mxu0 0.0
    %376 = vmatpush1.msra.mxu0 0.0
    %377 = vmatprep.subr.mxu0 0.0
    %378 = vmatpush1.msra.mxu0 0.0
    %379 = vmatprep.subr.mxu0 0.0
    %380 = vmatpush1.msra.mxu0 0.0
    %381 = vmatprep.subr.mxu0 0.0
    %382 = vmatpush1.msra.mxu0 0.0
    %383 = vmatprep.subr.mxu0 0.0
    %384 = vmatpush1.msra.mxu0 0.0
    %385 = vmatprep.subr.mxu0 0.0
    %386 = vmatpush1.msra.mxu0 0.0
    %387 = vmatprep.subr.mxu0 0.0
    %388 = vmatpush1.msra.mxu0 0.0
    %389 = vmatprep.subr.mxu0 0.0
    %390 = vmatpush1.msra.mxu0 0.0
    %391 = vmatprep.subr.mxu0 0.0
    %392 = vmatpush1.msra.mxu0 0.0
    %393 = vmatprep.subr.mxu0 0.0
    %394 = vmatpush1.msra.mxu0 0.0
    %395 = vmatprep.mubr.f32.mxu0 0.0
    %396 = vmatmul.mubr.f32.gmra.mrb[0].mxu0 %v327
    %v397 = vpop.f32.mrb[0].mxu0
    %v398 = vadd.f32 0.0, %v397
    %v399 = vpop.f32.mrb[0].mxu0
    %400 = vmatprep.mubr.f32.mxu0 0.0
    %401 = vmatmul.mubr.f32.gmra.mrb[0].mxu0 %v329
    %v402 = vpop.f32.mrb[0].mxu0
    %v403 = vadd.f32 0.0, %v402
    %v404 = vpop.f32.mrb[0].mxu0
    %405 = vdwg.mxu0
    %v406 = vmul.f32 %v398, %v306
    %v407 = vmul.f32 %v403, %v308
    %410 = vrot.lane.b32.xlu0 %v406, 32
    %v411 = vpop.permute.xlu0 %410
    %412 = vrot.lane.b32.xlu0 %v407, 32
    %v413 = vpop.permute.xlu0 %412
    %v416 = vadd.f32 %v321, %v411
    %v417 = vadd.f32 %v322, %v413
    %v418 = vld [vmem:[%s9] sm:$0xff]
    %v419 = vld [vmem:[%s9 + $0x8] sm:$0xff]
    %v420 = vpack.c.bf16 %v314, %v313
    %v421 = vpack.c.bf16 %v417, %v416
    %v422 = vpack.c.bf16 %v211, %v206
    %424 = vrot.lane.b32.xlu0 %v421, 96
    %v425 = vpop.permute.xlu0 %424
    %vm426 = vcmask 64512
    %v428 = vsel %vm426, %v420, 0
    %v431 = vsel %vm426, %v425, 0
    %433 = vmatprep.subr.bf16.mxu0 0
    %434 = vmatpush1.bf16.xpose.msra.mxu0 %v431
    %435 = vmatprep.subr.bf16.mxu0 0
    %436 = vmatpush1.bf16.xpose.msra.mxu0 0
    %437 = vmatprep.subr.bf16.mxu0 0
    %438 = vmatpush1.bf16.xpose.msra.mxu0 0
    %439 = vmatprep.subr.bf16.mxu0 0
    %440 = vmatpush1.bf16.xpose.msra.mxu0 0
    %441 = vmatprep.subr.bf16.mxu0 0
    %442 = vmatpush1.bf16.xpose.msra.mxu0 0
    %443 = vmatprep.subr.bf16.mxu0 0
    %444 = vmatpush1.bf16.xpose.msra.mxu0 0
    %445 = vmatprep.subr.bf16.mxu0 0
    %446 = vmatpush1.bf16.xpose.msra.mxu0 0
    %447 = vmatprep.subr.bf16.mxu0 0
    %448 = vmatpush1.bf16.xpose.msra.mxu0 0
    %449 = vmatprep.subr.bf16.mxu0 0
    %450 = vmatpush1.bf16.xpose.msra.mxu0 0
    %451 = vmatprep.subr.bf16.mxu0 0
    %452 = vmatpush1.bf16.xpose.msra.mxu0 0
    %453 = vmatprep.subr.bf16.mxu0 0
    %454 = vmatpush1.bf16.xpose.msra.mxu0 0
    %455 = vmatprep.subr.bf16.mxu0 0
    %456 = vmatpush1.bf16.xpose.msra.mxu0 0
    %457 = vmatprep.subr.bf16.mxu0 0
    %458 = vmatpush1.bf16.xpose.msra.mxu0 0
    %459 = vmatprep.subr.bf16.mxu0 0
    %460 = vmatpush1.bf16.xpose.msra.mxu0 0
    %461 = vmatprep.subr.bf16.mxu0 0
    %462 = vmatpush1.bf16.xpose.msra.mxu0 0
    %463 = vmatprep.subr.bf16.mxu0 0
    %464 = vmatpush1.bf16.xpose.msra.mxu0 0
    %465 = vmatprep.mubr.bf16.mxu0 0
    %466 = vmatmul.mubr.bf16.gmra.mrb[0].mxu0 %v428
    %v467 = vpop.f32.mrb[0].mxu0
    %v468 = vadd.f32 0.0, %v467
    %v469 = vpop.f32.mrb[0].mxu0
    %v470 = vpop.f32.mrb[0].mxu0
    %v471 = vadd.f32 0.0, %v470
    %v472 = vpop.f32.mrb[0].mxu0
    %473 = vdwg.mxu0
    %v474 = vmul.f32 %v468, 0.35355338
    %v475 = vmul.f32 %v471, 0.35355338
    %v476 = vadd.f32 %v474, %v418
    %v477 = vadd.f32 %v475, %v419
    %vm478 = vcmask 130048
    %v479 = vsel %vm478, %v476, -inf
    %480 = vmax.xlane.f32.xlu0 %v479
    %v481 = vpop.xlane.xlu0 %480
    %v482 = vsel %vm478, %v477, -inf
    %483 = vmax.xlane.f32.xlu0 %v482
    %v484 = vpop.xlane.xlu0 %483
    %v485 = vsub.f32 %v476, %v481
    %v486 = vsub.f32 %v477, %v484
    %v487 = vmul.f32 %v485, 1.442695
    %v488 = vpow.pop %v487
    %v489 = vmul.f32 %v486, 1.442695
    %v490 = vpow.pop %v489
    %v491 = vsel %vm478, %v488, 0.0
    %492 = vadd.xlane.f32.xlu0 %v491
    %v493 = vpop.xlane.xlu0 %492
    %v494 = vsel %vm478, %v490, 0.0
    %495 = vadd.xlane.f32.xlu0 %v494
    %v496 = vpop.xlane.xlu0 %495
    %v497 = vrcp.pop %v493
    %v498 = vrcp.pop %v496
    %v499 = vmul.f32 %v488, %v497
    %v500 = vmul.f32 %v490, %v498
    %v501 = vpack.c.bf16 %v500, %v499
    %503 = vrot.lane.b32.xlu0 %v422, 64
    %v504 = vpop.permute.xlu0 %503
    %v507 = vsel %vm478, %v501, 0
    %509 = vmatprep.subr.bf16.mxu0 0
    %510 = vmatpush1.bf16.msra.mxu0 %v504
    %511 = vmatprep.subr.bf16.mxu0 0
    %512 = vmatpush1.bf16.msra.mxu0 0
    %513 = vmatprep.subr.bf16.mxu0 0
    %514 = vmatpush1.bf16.msra.mxu0 0
    %515 = vmatprep.subr.bf16.mxu0 0
    %516 = vmatpush1.bf16.msra.mxu0 0
    %517 = vmatprep.subr.bf16.mxu0 0
    %518 = vmatpush1.bf16.msra.mxu0 0
    %519 = vmatprep.subr.bf16.mxu0 0
    %520 = vmatpush1.bf16.msra.mxu0 0
    %521 = vmatprep.subr.bf16.mxu0 0
    %522 = vmatpush1.bf16.msra.mxu0 0
    %523 = vmatprep.subr.bf16.mxu0 0
    %524 = vmatpush1.bf16.msra.mxu0 0
    %525 = vmatprep.subr.bf16.mxu0 0
    %526 = vmatpush1.bf16.msra.mxu0 0
    %527 = vmatprep.subr.bf16.mxu0 0
    %528 = vmatpush1.bf16.msra.mxu0 0
    %529 = vmatprep.subr.bf16.mxu0 0
    %530 = vmatpush1.bf16.msra.mxu0 0
    %531 = vmatprep.subr.bf16.mxu0 0
    %532 = vmatpush1.bf16.msra.mxu0 0
    %533 = vmatprep.subr.bf16.mxu0 0
    %534 = vmatpush1.bf16.msra.mxu0 0
    %535 = vmatprep.subr.bf16.mxu0 0
    %536 = vmatpush1.bf16.msra.mxu0 0
    %537 = vmatprep.subr.bf16.mxu0 0
    %538 = vmatpush1.bf16.msra.mxu0 0
    %539 = vmatprep.subr.bf16.mxu0 0
    %540 = vmatpush1.bf16.msra.mxu0 0
    %541 = vmatprep.mubr.bf16.mxu0 0
    %542 = vmatmul.mubr.bf16.gmra.mrb[0].mxu0 %v507
    %v543 = vpop.f32.mrb[0].mxu0
    %v544 = vadd.f32 0.0, %v543
    %v545 = vpop.f32.mrb[0].mxu0
    %v546 = vpop.f32.mrb[0].mxu0
    %v547 = vadd.f32 0.0, %v546
    %v548 = vpop.f32.mrb[0].mxu0
    %549 = vdwg.mxu0
    %551 = vrot.lane.b32.xlu0 %v420, 120
    %v552 = vpop.permute.xlu0 %551
    %553 = vrot.lane.b32.xlu0 %v421, 88
    %v554 = vpop.permute.xlu0 %553
    %v556 = vsel %vm426, %v552, 0
    %v559 = vsel %vm426, %v554, 0
    %561 = vmatprep.subr.bf16.mxu0 0
    %562 = vmatpush1.bf16.xpose.msra.mxu0 %v559
    %563 = vmatprep.subr.bf16.mxu0 0
    %564 = vmatpush1.bf16.xpose.msra.mxu0 0
    %565 = vmatprep.subr.bf16.mxu0 0
    %566 = vmatpush1.bf16.xpose.msra.mxu0 0
    %567 = vmatprep.subr.bf16.mxu0 0
    %568 = vmatpush1.bf16.xpose.msra.mxu0 0
    %569 = vmatprep.subr.bf16.mxu0 0
    %570 = vmatpush1.bf16.xpose.msra.mxu0 0
    %571 = vmatprep.subr.bf16.mxu0 0
    %572 = vmatpush1.bf16.xpose.msra.mxu0 0
    %573 = vmatprep.subr.bf16.mxu0 0
    %574 = vmatpush1.bf16.xpose.msra.mxu0 0
    %575 = vmatprep.subr.bf16.mxu0 0
    %576 = vmatpush1.bf16.xpose.msra.mxu0 0
    %577 = vmatprep.subr.bf16.mxu0 0
    %578 = vmatpush1.bf16.xpose.msra.mxu0 0
    %579 = vmatprep.subr.bf16.mxu0 0
    %580 = vmatpush1.bf16.xpose.msra.mxu0 0
    %581 = vmatprep.subr.bf16.mxu0 0
    %582 = vmatpush1.bf16.xpose.msra.mxu0 0
    %583 = vmatprep.subr.bf16.mxu0 0
    %584 = vmatpush1.bf16.xpose.msra.mxu0 0
    %585 = vmatprep.subr.bf16.mxu0 0
    %586 = vmatpush1.bf16.xpose.msra.mxu0 0
    %587 = vmatprep.subr.bf16.mxu0 0
    %588 = vmatpush1.bf16.xpose.msra.mxu0 0
    %589 = vmatprep.subr.bf16.mxu0 0
    %590 = vmatpush1.bf16.xpose.msra.mxu0 0
    %591 = vmatprep.subr.bf16.mxu0 0
    %592 = vmatpush1.bf16.xpose.msra.mxu0 0
    %593 = vmatprep.mubr.bf16.mxu0 0
    %594 = vmatmul.mubr.bf16.gmra.mrb[0].mxu0 %v556
    %v595 = vpop.f32.mrb[0].mxu0
    %v596 = vadd.f32 0.0, %v595
    %v597 = vpop.f32.mrb[0].mxu0
    %v598 = vpop.f32.mrb[0].mxu0
    %v599 = vadd.f32 0.0, %v598
    %v600 = vpop.f32.mrb[0].mxu0
    %601 = vdwg.mxu0
    %v602 = vmul.f32 %v596, 0.35355338
    %v603 = vmul.f32 %v599, 0.35355338
    %v604 = vadd.f32 %v602, %v418
    %v605 = vadd.f32 %v603, %v419
    %v606 = vsel %vm478, %v604, -inf
    %607 = vmax.xlane.f32.xlu0 %v606
    %v608 = vpop.xlane.xlu0 %607
    %v609 = vsel %vm478, %v605, -inf
    %610 = vmax.xlane.f32.xlu0 %v609
    %v611 = vpop.xlane.xlu0 %610
    %v612 = vsub.f32 %v604, %v608
    %v613 = vsub.f32 %v605, %v611
    %v614 = vmul.f32 %v612, 1.442695
    %v615 = vpow.pop %v614
    %v616 = vmul.f32 %v613, 1.442695
    %v617 = vpow.pop %v616
    %v618 = vsel %vm478, %v615, 0.0
    %619 = vadd.xlane.f32.xlu0 %v618
    %v620 = vpop.xlane.xlu0 %619
    %v621 = vsel %vm478, %v617, 0.0
    %622 = vadd.xlane.f32.xlu0 %v621
    %v623 = vpop.xlane.xlu0 %622
    %v624 = vrcp.pop %v620
    %v625 = vrcp.pop %v623
    %v626 = vmul.f32 %v615, %v624
    %v627 = vmul.f32 %v617, %v625
    %v628 = vpack.c.bf16 %v627, %v626
    %629 = vrot.lane.b32.xlu0 %v422, 56
    %v630 = vpop.permute.xlu0 %629
    %v633 = vsel %vm478, %v628, 0
    %635 = vmatprep.subr.bf16.mxu0 0
    %636 = vmatpush1.bf16.msra.mxu0 %v630
    %637 = vmatprep.subr.bf16.mxu0 0
    %638 = vmatpush1.bf16.msra.mxu0 0
    %639 = vmatprep.subr.bf16.mxu0 0
    %640 = vmatpush1.bf16.msra.mxu0 0
    %641 = vmatprep.subr.bf16.mxu0 0
    %642 = vmatpush1.bf16.msra.mxu0 0
    %643 = vmatprep.subr.bf16.mxu0 0
    %644 = vmatpush1.bf16.msra.mxu0 0
    %645 = vmatprep.subr.bf16.mxu0 0
    %646 = vmatpush1.bf16.msra.mxu0 0
    %647 = vmatprep.subr.bf16.mxu0 0
    %648 = vmatpush1.bf16.msra.mxu0 0
    %649 = vmatprep.subr.bf16.mxu0 0
    %650 = vmatpush1.bf16.msra.mxu0 0
    %651 = vmatprep.subr.bf16.mxu0 0
    %652 = vmatpush1.bf16.msra.mxu0 0
    %653 = vmatprep.subr.bf16.mxu0 0
    %654 = vmatpush1.bf16.msra.mxu0 0
    %655 = vmatprep.subr.bf16.mxu0 0
    %656 = vmatpush1.bf16.msra.mxu0 0
    %657 = vmatprep.subr.bf16.mxu0 0
    %658 = vmatpush1.bf16.msra.mxu0 0
    %659 = vmatprep.subr.bf16.mxu0 0
    %660 = vmatpush1.bf16.msra.mxu0 0
    %661 = vmatprep.subr.bf16.mxu0 0
    %662 = vmatpush1.bf16.msra.mxu0 0
    %663 = vmatprep.subr.bf16.mxu0 0
    %664 = vmatpush1.bf16.msra.mxu0 0
    %665 = vmatprep.subr.bf16.mxu0 0
    %666 = vmatpush1.bf16.msra.mxu0 0
    %667 = vmatprep.mubr.bf16.mxu0 0
    %668 = vmatmul.mubr.bf16.gmra.mrb[0].mxu0 %v633
    %v669 = vpop.f32.mrb[0].mxu0
    %v670 = vadd.f32 0.0, %v669
    %v671 = vpop.f32.mrb[0].mxu0
    %v672 = vpop.f32.mrb[0].mxu0
    %v673 = vadd.f32 0.0, %v672
    %v674 = vpop.f32.mrb[0].mxu0
    %675 = vdwg.mxu0
    %676 = vrot.lane.b32.xlu0 %v420, 112
    %v677 = vpop.permute.xlu0 %676
    %678 = vrot.lane.b32.xlu0 %v421, 80
    %v679 = vpop.permute.xlu0 %678
    %v681 = vsel %vm426, %v677, 0
    %v684 = vsel %vm426, %v679, 0
    %686 = vmatprep.subr.bf16.mxu0 0
    %687 = vmatpush1.bf16.xpose.msra.mxu0 %v684
    %688 = vmatprep.subr.bf16.mxu0 0
    %689 = vmatpush1.bf16.xpose.msra.mxu0 0
    %690 = vmatprep.subr.bf16.mxu0 0
    %691 = vmatpush1.bf16.xpose.msra.mxu0 0
    %692 = vmatprep.subr.bf16.mxu0 0
    %693 = vmatpush1.bf16.xpose.msra.mxu0 0
    %694 = vmatprep.subr.bf16.mxu0 0
    %695 = vmatpush1.bf16.xpose.msra.mxu0 0
    %696 = vmatprep.subr.bf16.mxu0 0
    %697 = vmatpush1.bf16.xpose.msra.mxu0 0
    %698 = vmatprep.subr.bf16.mxu0 0
    %699 = vmatpush1.bf16.xpose.msra.mxu0 0
    %700 = vmatprep.subr.bf16.mxu0 0
    %701 = vmatpush1.bf16.xpose.msra.mxu0 0
    %702 = vmatprep.subr.bf16.mxu0 0
    %703 = vmatpush1.bf16.xpose.msra.mxu0 0
    %704 = vmatprep.subr.bf16.mxu0 0
    %705 = vmatpush1.bf16.xpose.msra.mxu0 0
    %706 = vmatprep.subr.bf16.mxu0 0
    %707 = vmatpush1.bf16.xpose.msra.mxu0 0
    %708 = vmatprep.subr.bf16.mxu0 0
    %709 = vmatpush1.bf16.xpose.msra.mxu0 0
    %710 = vmatprep.subr.bf16.mxu0 0
    %711 = vmatpush1.bf16.xpose.msra.mxu0 0
    %712 = vmatprep.subr.bf16.mxu0 0
    %713 = vmatpush1.bf16.xpose.msra.mxu0 0
    %714 = vmatprep.subr.bf16.mxu0 0
    %715 = vmatpush1.bf16.xpose.msra.mxu0 0
    %716 = vmatprep.subr.bf16.mxu0 0
    %717 = vmatpush1.bf16.xpose.msra.mxu0 0
    %718 = vmatprep.mubr.bf16.mxu0 0
    %719 = vmatmul.mubr.bf16.gmra.mrb[0].mxu0 %v681
    %v720 = vpop.f32.mrb[0].mxu0
    %v721 = vadd.f32 0.0, %v720
    %v722 = vpop.f32.mrb[0].mxu0
    %v723 = vpop.f32.mrb[0].mxu0
    %v724 = vadd.f32 0.0, %v723
    %v725 = vpop.f32.mrb[0].mxu0
    %726 = vdwg.mxu0
    %v727 = vmul.f32 %v721, 0.35355338
    %v728 = vmul.f32 %v724, 0.35355338
    %v729 = vadd.f32 %v727, %v418
    %v730 = vadd.f32 %v728, %v419
    %v731 = vsel %vm478, %v729, -inf
    %732 = vmax.xlane.f32.xlu0 %v731
    %v733 = vpop.xlane.xlu0 %732
    %v734 = vsel %vm478, %v730, -inf
    %735 = vmax.xlane.f32.xlu0 %v734
    %v736 = vpop.xlane.xlu0 %735
    %v737 = vsub.f32 %v729, %v733
    %v738 = vsub.f32 %v730, %v736
    %v739 = vmul.f32 %v737, 1.442695
    %v740 = vpow.pop %v739
    %v741 = vmul.f32 %v738, 1.442695
    %v742 = vpow.pop %v741
    %v743 = vsel %vm478, %v740, 0.0
    %744 = vadd.xlane.f32.xlu0 %v743
    %v745 = vpop.xlane.xlu0 %744
    %v746 = vsel %vm478, %v742, 0.0
    %747 = vadd.xlane.f32.xlu0 %v746
    %v748 = vpop.xlane.xlu0 %747
    %v749 = vrcp.pop %v745
    %v750 = vrcp.pop %v748
    %v751 = vmul.f32 %v740, %v749
    %v752 = vmul.f32 %v742, %v750
    %v753 = vpack.c.bf16 %v752, %v751
    %754 = vrot.lane.b32.xlu0 %v422, 48
    %v755 = vpop.permute.xlu0 %754
    %v758 = vsel %vm478, %v753, 0
    %760 = vmatprep.subr.bf16.mxu0 0
    %761 = vmatpush1.bf16.msra.mxu0 %v755
    %762 = vmatprep.subr.bf16.mxu0 0
    %763 = vmatpush1.bf16.msra.mxu0 0
    %764 = vmatprep.subr.bf16.mxu0 0
    %765 = vmatpush1.bf16.msra.mxu0 0
    %766 = vmatprep.subr.bf16.mxu0 0
    %767 = vmatpush1.bf16.msra.mxu0 0
    %768 = vmatprep.subr.bf16.mxu0 0
    %769 = vmatpush1.bf16.msra.mxu0 0
    %770 = vmatprep.subr.bf16.mxu0 0
    %771 = vmatpush1.bf16.msra.mxu0 0
    %772 = vmatprep.subr.bf16.mxu0 0
    %773 = vmatpush1.bf16.msra.mxu0 0
    %774 = vmatprep.subr.bf16.mxu0 0
    %775 = vmatpush1.bf16.msra.mxu0 0
    %776 = vmatprep.subr.bf16.mxu0 0
    %777 = vmatpush1.bf16.msra.mxu0 0
    %778 = vmatprep.subr.bf16.mxu0 0
    %779 = vmatpush1.bf16.msra.mxu0 0
    %780 = vmatprep.subr.bf16.mxu0 0
    %781 = vmatpush1.bf16.msra.mxu0 0
    %782 = vmatprep.subr.bf16.mxu0 0
    %783 = vmatpush1.bf16.msra.mxu0 0
    %784 = vmatprep.subr.bf16.mxu0 0
    %785 = vmatpush1.bf16.msra.mxu0 0
    %786 = vmatprep.subr.bf16.mxu0 0
    %787 = vmatpush1.bf16.msra.mxu0 0
    %788 = vmatprep.subr.bf16.mxu0 0
    %789 = vmatpush1.bf16.msra.mxu0 0
    %790 = vmatprep.subr.bf16.mxu0 0
    %791 = vmatpush1.bf16.msra.mxu0 0
    %792 = vmatprep.mubr.bf16.mxu0 0
    %793 = vmatmul.mubr.bf16.gmra.mrb[0].mxu0 %v758
    %v794 = vpop.f32.mrb[0].mxu0
    %v795 = vadd.f32 0.0, %v794
    %v796 = vpop.f32.mrb[0].mxu0
    %v797 = vpop.f32.mrb[0].mxu0
    %v798 = vadd.f32 0.0, %v797
    %v799 = vpop.f32.mrb[0].mxu0
    %800 = vdwg.mxu0
    %801 = vrot.lane.b32.xlu0 %v420, 104
    %v802 = vpop.permute.xlu0 %801
    %803 = vrot.lane.b32.xlu0 %v421, 72
    %v804 = vpop.permute.xlu0 %803
    %v806 = vsel %vm426, %v802, 0
    %v809 = vsel %vm426, %v804, 0
    %811 = vmatprep.subr.bf16.mxu0 0
    %812 = vmatpush1.bf16.xpose.msra.mxu0 %v809
    %813 = vmatprep.subr.bf16.mxu0 0
    %814 = vmatpush1.bf16.xpose.msra.mxu0 0
    %815 = vmatprep.subr.bf16.mxu0 0
    %816 = vmatpush1.bf16.xpose.msra.mxu0 0
    %817 = vmatprep.subr.bf16.mxu0 0
    %818 = vmatpush1.bf16.xpose.msra.mxu0 0
    %819 = vmatprep.subr.bf16.mxu0 0
    %820 = vmatpush1.bf16.xpose.msra.mxu0 0
    %821 = vmatprep.subr.bf16.mxu0 0
    %822 = vmatpush1.bf16.xpose.msra.mxu0 0
    %823 = vmatprep.subr.bf16.mxu0 0
    %824 = vmatpush1.bf16.xpose.msra.mxu0 0
    %825 = vmatprep.subr.bf16.mxu0 0
    %826 = vmatpush1.bf16.xpose.msra.mxu0 0
    %827 = vmatprep.subr.bf16.mxu0 0
    %828 = vmatpush1.bf16.xpose.msra.mxu0 0
    %829 = vmatprep.subr.bf16.mxu0 0
    %830 = vmatpush1.bf16.xpose.msra.mxu0 0
    %831 = vmatprep.subr.bf16.mxu0 0
    %832 = vmatpush1.bf16.xpose.msra.mxu0 0
    %833 = vmatprep.subr.bf16.mxu0 0
    %834 = vmatpush1.bf16.xpose.msra.mxu0 0
    %835 = vmatprep.subr.bf16.mxu0 0
    %836 = vmatpush1.bf16.xpose.msra.mxu0 0
    %837 = vmatprep.subr.bf16.mxu0 0
    %838 = vmatpush1.bf16.xpose.msra.mxu0 0
    %839 = vmatprep.subr.bf16.mxu0 0
    %840 = vmatpush1.bf16.xpose.msra.mxu0 0
    %841 = vmatprep.subr.bf16.mxu0 0
    %842 = vmatpush1.bf16.xpose.msra.mxu0 0
    %843 = vmatprep.mubr.bf16.mxu0 0
    %844 = vmatmul.mubr.bf16.gmra.mrb[0].mxu0 %v806
    %v845 = vpop.f32.mrb[0].mxu0
    %v846 = vadd.f32 0.0, %v845
    %v847 = vpop.f32.mrb[0].mxu0
    %v848 = vpop.f32.mrb[0].mxu0
    %v849 = vadd.f32 0.0, %v848
    %v850 = vpop.f32.mrb[0].mxu0
    %851 = vdwg.mxu0
    %v852 = vmul.f32 %v846, 0.35355338
    %v853 = vmul.f32 %v849, 0.35355338
    %v854 = vadd.f32 %v852, %v418
    %v855 = vadd.f32 %v853, %v419
    %v856 = vsel %vm478, %v854, -inf
    %857 = vmax.xlane.f32.xlu0 %v856
    %v858 = vpop.xlane.xlu0 %857
    %v859 = vsel %vm478, %v855, -inf
    %860 = vmax.xlane.f32.xlu0 %v859
    %v861 = vpop.xlane.xlu0 %860
    %v862 = vsub.f32 %v854, %v858
    %v863 = vsub.f32 %v855, %v861
    %v864 = vmul.f32 %v862, 1.442695
    %v865 = vpow.pop %v864
    %v866 = vmul.f32 %v863, 1.442695
    %v867 = vpow.pop %v866
    %v868 = vsel %vm478, %v865, 0.0
    %869 = vadd.xlane.f32.xlu0 %v868
    %v870 = vpop.xlane.xlu0 %869
    %v871 = vsel %vm478, %v867, 0.0
    %872 = vadd.xlane.f32.xlu0 %v871
    %v873 = vpop.xlane.xlu0 %872
    %v874 = vrcp.pop %v870
    %v875 = vrcp.pop %v873
    %v876 = vmul.f32 %v865, %v874
    %v877 = vmul.f32 %v867, %v875
    %v878 = vpack.c.bf16 %v877, %v876
    %879 = vrot.lane.b32.xlu0 %v422, 40
    %v880 = vpop.permute.xlu0 %879
    %v883 = vsel %vm478, %v878, 0
    %885 = vmatprep.subr.bf16.mxu0 0
    %886 = vmatpush1.bf16.msra.mxu0 %v880
    %887 = vmatprep.subr.bf16.mxu0 0
    %888 = vmatpush1.bf16.msra.mxu0 0
    %889 = vmatprep.subr.bf16.mxu0 0
    %890 = vmatpush1.bf16.msra.mxu0 0
    %891 = vmatprep.subr.bf16.mxu0 0
    %892 = vmatpush1.bf16.msra.mxu0 0
    %893 = vmatprep.subr.bf16.mxu0 0
    %894 = vmatpush1.bf16.msra.mxu0 0
    %895 = vmatprep.subr.bf16.mxu0 0
    %896 = vmatpush1.bf16.msra.mxu0 0
    %897 = vmatprep.subr.bf16.mxu0 0
    %898 = vmatpush1.bf16.msra.mxu0 0
    %899 = vmatprep.subr.bf16.mxu0 0
    %900 = vmatpush1.bf16.msra.mxu0 0
    %901 = vmatprep.subr.bf16.mxu0 0
    %902 = vmatpush1.bf16.msra.mxu0 0
    %903 = vmatprep.subr.bf16.mxu0 0
    %904 = vmatpush1.bf16.msra.mxu0 0
    %905 = vmatprep.subr.bf16.mxu0 0
    %906 = vmatpush1.bf16.msra.mxu0 0
    %907 = vmatprep.subr.bf16.mxu0 0
    %908 = vmatpush1.bf16.msra.mxu0 0
    %909 = vmatprep.subr.bf16.mxu0 0
    %910 = vmatpush1.bf16.msra.mxu0 0
    %911 = vmatprep.subr.bf16.mxu0 0
    %912 = vmatpush1.bf16.msra.mxu0 0
    %913 = vmatprep.subr.bf16.mxu0 0
    %914 = vmatpush1.bf16.msra.mxu0 0
    %915 = vmatprep.subr.bf16.mxu0 0
    %916 = vmatpush1.bf16.msra.mxu0 0
    %917 = vmatprep.mubr.bf16.mxu0 0
    %918 = vmatmul.mubr.bf16.gmra.mrb[0].mxu0 %v883
    %v919 = vpop.f32.mrb[0].mxu0
    %v920 = vadd.f32 0.0, %v919
    %v921 = vpop.f32.mrb[0].mxu0
    %v922 = vpop.f32.mrb[0].mxu0
    %v923 = vadd.f32 0.0, %v922
    %v924 = vpop.f32.mrb[0].mxu0
    %925 = vdwg.mxu0
    %928 = vrot.lane.b32.xlu0 %v670, 8
    %v929 = vpop.permute.xlu0 %928
    %930 = vrot.lane.b32.xlu0 %v673, 8
    %v931 = vpop.permute.xlu0 %930
    %936 = vrot.lane.b32.xlu0 %v795, 16
    %v937 = vpop.permute.xlu0 %936
    %938 = vrot.lane.b32.xlu0 %v798, 16
    %v939 = vpop.permute.xlu0 %938
    %944 = vrot.lane.b32.xlu0 %v920, 24
    %v945 = vpop.permute.xlu0 %944
    %946 = vrot.lane.b32.xlu0 %v923, 24
    %v947 = vpop.permute.xlu0 %946
    %v950 = vsel %vm426, %v544, %v929
    %v951 = vsel %vm426, %v547, %v931
    %v952 = vsel %vm478, %v950, %v937
    %v953 = vsel %vm478, %v951, %v939
    %vm954 = vcmask 195584
    %v955 = vsel %vm954, %v952, %v945
    %v956 = vsel %vm954, %v953, %v947
    %s957 = scalar_lea.vmem %s3, 32
    %v958 = vld [vmem:[%s957] sm:$0xff]
    %v959 = vld [vmem:[%s957 + $0x8] sm:$0xff]
    %v960 = vld [vmem:[%s957 + $0x10] sm:$0xff]
    %v961 = vld [vmem:[%s957 + $0x18] sm:$0xff]
    %v963 = vsel %vm82, %v955, 0
    %v966 = vsel %vm82, %v956, 0
    %968 = vmatprep.subr.mxu0 0.0
    %969 = vmatpush1.msra.mxu0 %v958
    %970 = vmatprep.subr.mxu0 0.0
    %971 = vmatpush1.msra.mxu0 %v959
    %972 = vmatprep.subr.mxu0 0.0
    %973 = vmatpush1.msra.mxu0 %v960
    %974 = vmatprep.subr.mxu0 0.0
    %975 = vmatpush1.msra.mxu0 %v961
    %976 = vmatprep.subr.mxu0 0.0
    %977 = vmatpush1.msra.mxu0 0.0
    %978 = vmatprep.subr.mxu0 0.0
    %979 = vmatpush1.msra.mxu0 0.0
    %980 = vmatprep.subr.mxu0 0.0
    %981 = vmatpush1.msra.mxu0 0.0
    %982 = vmatprep.subr.mxu0 0.0
    %983 = vmatpush1.msra.mxu0 0.0
    %984 = vmatprep.subr.mxu0 0.0
    %985 = vmatpush1.msra.mxu0 0.0
    %986 = vmatprep.subr.mxu0 0.0
    %987 = vmatpush1.msra.mxu0 0.0
    %988 = vmatprep.subr.mxu0 0.0
    %989 = vmatpush1.msra.mxu0 0.0
    %990 = vmatprep.subr.mxu0 0.0
    %991 = vmatpush1.msra.mxu0 0.0
    %992 = vmatprep.subr.mxu0 0.0
    %993 = vmatpush1.msra.mxu0 0.0
    %994 = vmatprep.subr.mxu0 0.0
    %995 = vmatpush1.msra.mxu0 0.0
    %996 = vmatprep.subr.mxu0 0.0
    %997 = vmatpush1.msra.mxu0 0.0
    %998 = vmatprep.subr.mxu0 0.0
    %999 = vmatpush1.msra.mxu0 0.0
    %1000 = vmatprep.subr.mxu0 0.0
    %1001 = vmatpush1.msra.mxu0 0.0
    %1002 = vmatprep.subr.mxu0 0.0
    %1003 = vmatpush1.msra.mxu0 0.0
    %1004 = vmatprep.subr.mxu0 0.0
    %1005 = vmatpush1.msra.mxu0 0.0
    %1006 = vmatprep.subr.mxu0 0.0
    %1007 = vmatpush1.msra.mxu0 0.0
    %1008 = vmatprep.subr.mxu0 0.0
    %1009 = vmatpush1.msra.mxu0 0.0
    %1010 = vmatprep.subr.mxu0 0.0
    %1011 = vmatpush1.msra.mxu0 0.0
    %1012 = vmatprep.subr.mxu0 0.0
    %1013 = vmatpush1.msra.mxu0 0.0
    %1014 = vmatprep.subr.mxu0 0.0
    %1015 = vmatpush1.msra.mxu0 0.0
    %1016 = vmatprep.subr.mxu0 0.0
    %1017 = vmatpush1.msra.mxu0 0.0
    %1018 = vmatprep.subr.mxu0 0.0
    %1019 = vmatpush1.msra.mxu0 0.0
    %1020 = vmatprep.subr.mxu0 0.0
    %1021 = vmatpush1.msra.mxu0 0.0
    %1022 = vmatprep.subr.mxu0 0.0
    %1023 = vmatpush1.msra.mxu0 0.0
    %1024 = vmatprep.subr.mxu0 0.0
    %1025 = vmatpush1.msra.mxu0 0.0
    %1026 = vmatprep.subr.mxu0 0.0
    %1027 = vmatpush1.msra.mxu0 0.0
    %1028 = vmatprep.subr.mxu0 0.0
    %1029 = vmatpush1.msra.mxu0 0.0
    %1030 = vmatprep.subr.mxu0 0.0
    %1031 = vmatpush1.msra.mxu0 0.0
    %1032 = vmatprep.mubr.f32.mxu0 0.0
    %1033 = vmatmul.mubr.f32.gmra.mrb[0].mxu0 %v963
    %v1034 = vpop.f32.mrb[0].mxu0
    %v1035 = vadd.f32 0.0, %v1034
    %v1036 = vpop.f32.mrb[0].mxu0
    %1037 = vmatprep.mubr.f32.mxu0 0.0
    %1038 = vmatmul.mubr.f32.gmra.mrb[0].mxu0 %v966
    %v1039 = vpop.f32.mrb[0].mxu0
    %v1040 = vadd.f32 0.0, %v1039
    %v1041 = vpop.f32.mrb[0].mxu0
    %1042 = vdwg.mxu0
    %v1043 = vadd.f32 %v74, %v1035
    %v1044 = vadd.f32 %v75, %v1040
    %v1045 = vlaneseq
    %v1046 = vshrl.u32 %v1045, 7
    %v1047 = vsub.s32 0, %v1046
    %v1048 = vrot.slane %v80, %v1047
    %v1049 = vadd.f32 %v1043, %v1048
    %v1050 = vadd.f32 %v1044, %v1048
    %v1051 = vsel %vm82, %v1049, 0.0
    %1052 = vadd.xlane.f32.xlu0 %v1051
    %v1053 = vpop.xlane.xlu0 %1052
    %v1054 = vsel %vm82, %v1050, 0.0
    %1055 = vadd.xlane.f32.xlu0 %v1054
    %v1056 = vpop.xlane.xlu0 %1055
    %v1057 = vmul.f32 %v1053, %v89
    %v1058 = vmul.f32 %v1056, %v89
    %v1059 = vsub.f32 %v1049, %v1057
    %v1060 = vsub.f32 %v1050, %v1058
    %v1061 = vmul.f32 %v1059, %v1059
    %v1062 = vmul.f32 %v1060, %v1060
    %v1063 = vsel %vm82, %v1061, 0.0
    %1064 = vadd.xlane.f32.xlu0 %v1063
    %v1065 = vpop.xlane.xlu0 %1064
    %v1066 = vsel %vm82, %v1062, 0.0
    %1067 = vadd.xlane.f32.xlu0 %v1066
    %v1068 = vpop.xlane.xlu0 %1067
    %v1069 = vmul.f32 %v1065, %v89
    %v1070 = vmul.f32 %v1068, %v89
    %v1071 = vadd.f32 %v1069, 1e-05
    %v1072 = vadd.f32 %v1070, 1e-05
    %v1073 = vrsqrt.pop %v1071
    %v1074 = vrsqrt.pop %v1072
    %v1075 = vmul.f32 %v1059, %v1073
    %v1076 = vmul.f32 %v1060, %v1074
    %v1077 = vlaneseq
    %v1078 = vshrl.u32 %v1077, 7
    %v1079 = vsub.s32 0, %v1078
    %v1080 = vrot.slane %v78, %v1079
    %v1081 = vmul.f32 %v1075, %v1080
    %v1082 = vmul.f32 %v1076, %v1080
    %v1083 = vlaneseq
    %v1084 = vshrl.u32 %v1083, 7
    %v1085 = vsub.s32 0, %v1084
    %v1086 = vrot.slane %v79, %v1085
    %v1087 = vadd.f32 %v1081, %v1086
    %v1088 = vadd.f32 %v1082, %v1086
    %v1089 = vld [vmem:[%s4] sm:$0xff]
    %v1090 = vld [vmem:[%s4 + $0x8] sm:$0xff]
    %v1091 = vld [vmem:[%s4 + $0x10] sm:$0xff]
    %v1092 = vld [vmem:[%s4 + $0x18] sm:$0xff]
    %v1093 = vld [vmem:[%s4 + $0x20] sm:$0xff]
    %v1094 = vld [vmem:[%s4 + $0x28] sm:$0xff]
    %v1095 = vld [vmem:[%s4 + $0x30] sm:$0xff]
    %v1096 = vld [vmem:[%s4 + $0x38] sm:$0xff]
    %v1097 = vld [vmem:[%s5] sm:$0x3]
    %v1099 = vlaneseq
    %v1100 = vshrl.u32 %v1099, 7
    %v1101 = vsub.s32 0, %v1100
    %v1102 = vrot.slane %v1097, %v1101
    %v1103 = vlaneseq
    %v1104 = vshrl.u32 %v1103, 7
    %v1105 = vsub.s32 1, %v1104
    %v1106 = vrot.slane %v1097, %v1105
    %v1110 = vsel %vm82, %v1087, 0
    %v1113 = vsel %vm82, %v1088, 0
    %1115 = vmatprep.subr.mxu0 %v1090
    %1116 = vmatpush1.msra.mxu0 %v1089
    %1117 = vmatprep.subr.mxu0 %v1092
    %1118 = vmatpush1.msra.mxu0 %v1091
    %1119 = vmatprep.subr.mxu0 %v1094
    %1120 = vmatpush1.msra.mxu0 %v1093
    %1121 = vmatprep.subr.mxu0 %v1096
    %1122 = vmatpush1.msra.mxu0 %v1095
    %1123 = vmatprep.subr.mxu0 0.0
    %1124 = vmatpush1.msra.mxu0 0.0
    %1125 = vmatprep.subr.mxu0 0.0
    %1126 = vmatpush1.msra.mxu0 0.0
    %1127 = vmatprep.subr.mxu0 0.0
    %1128 = vmatpush1.msra.mxu0 0.0
    %1129 = vmatprep.subr.mxu0 0.0
    %1130 = vmatpush1.msra.mxu0 0.0
    %1131 = vmatprep.subr.mxu0 0.0
    %1132 = vmatpush1.msra.mxu0 0.0
    %1133 = vmatprep.subr.mxu0 0.0
    %1134 = vmatpush1.msra.mxu0 0.0
    %1135 = vmatprep.subr.mxu0 0.0
    %1136 = vmatpush1.msra.mxu0 0.0
    %1137 = vmatprep.subr.mxu0 0.0
    %1138 = vmatpush1.msra.mxu0 0.0
    %1139 = vmatprep.subr.mxu0 0.0
    %1140 = vmatpush1.msra.mxu0 0.0
    %1141 = vmatprep.subr.mxu0 0.0
    %1142 = vmatpush1.msra.mxu0 0.0
    %1143 = vmatprep.subr.mxu0 0.0
    %1144 = vmatpush1.msra.mxu0 0.0
    %1145 = vmatprep.subr.mxu0 0.0
    %1146 = vmatpush1.msra.mxu0 0.0
    %1147 = vmatprep.subr.mxu0 0.0
    %1148 = vmatpush1.msra.mxu0 0.0
    %1149 = vmatprep.subr.mxu0 0.0
    %1150 = vmatpush1.msra.mxu0 0.0
    %1151 = vmatprep.subr.mxu0 0.0
    %1152 = vmatpush1.msra.mxu0 0.0
    %1153 = vmatprep.subr.mxu0 0.0
    %1154 = vmatpush1.msra.mxu0 0.0
    %1155 = vmatprep.subr.mxu0 0.0
    %1156 = vmatpush1.msra.mxu0 0.0
    %1157 = vmatprep.subr.mxu0 0.0
    %1158 = vmatpush1.msra.mxu0 0.0
    %1159 = vmatprep.subr.mxu0 0.0
    %1160 = vmatpush1.msra.mxu0 0.0
    %1161 = vmatprep.subr.mxu0 0.0
    %1162 = vmatpush1.msra.mxu0 0.0
    %1163 = vmatprep.subr.mxu0 0.0
    %1164 = vmatpush1.msra.mxu0 0.0
    %1165 = vmatprep.subr.mxu0 0.0
    %1166 = vmatpush1.msra.mxu0 0.0
    %1167 = vmatprep.subr.mxu0 0.0
    %1168 = vmatpush1.msra.mxu0 0.0
    %1169 = vmatprep.subr.mxu0 0.0
    %1170 = vmatpush1.msra.mxu0 0.0
    %1171 = vmatprep.subr.mxu0 0.0
    %1172 = vmatpush1.msra.mxu0 0.0
    %1173 = vmatprep.subr.mxu0 0.0
    %1174 = vmatpush1.msra.mxu0 0.0
    %1175 = vmatprep.subr.mxu0 0.0
    %1176 = vmatpush1.msra.mxu0 0.0
    %1177 = vmatprep.subr.mxu0 0.0
    %1178 = vmatpush1.msra.mxu0 0.0
    %1179 = vmatprep.mubr.f32.mxu0 0.0
    %1180 = vmatmul.mubr.f32.gmra.mrb[0].mxu0 %v1110
    %v1181 = vpop.f32.mrb[0].mxu0
    %v1182 = vadd.f32 %v1102, %v1181
    %v1183 = vpop.f32.mrb[0].mxu0
    %v1184 = vadd.f32 %v1106, %v1183
    %1185 = vmatprep.mubr.f32.mxu0 0.0
    %1186 = vmatmul.mubr.f32.gmra.mrb[0].mxu0 %v1113
    %v1187 = vpop.f32.mrb[0].mxu0
    %v1188 = vadd.f32 %v1102, %v1187
    %v1189 = vpop.f32.mrb[0].mxu0
    %v1190 = vadd.f32 %v1106, %v1189
    %1191 = vdwg.mxu0
    %v1192 = vmul.f32 %v1182, 0.5
    %v1193 = vmul.f32 %v1188, 0.5
    %v1194 = vmul.f32 %v1182, 0.044715
    %v1195 = vmul.f32 %v1188, 0.044715
    %v1196 = vmul.f32 %v1194, %v1182
    %v1197 = vmul.f32 %v1195, %v1188
    %v1198 = vmul.f32 %v1196, %v1182
    %v1199 = vmul.f32 %v1197, %v1188
    %v1200 = vadd.f32 %v1182, %v1198
    %v1201 = vadd.f32 %v1188, %v1199
    %v1202 = vmul.f32 %v1200, 0.7978846
    %v1203 = vmul.f32 %v1201, 0.7978846
    %v1204 = vtanh.pop %v1202
    %v1205 = vtanh.pop %v1203
    %v1206 = vadd.f32 %v1204, 1.0
    %v1207 = vadd.f32 %v1205, 1.0
    %v1208 = vmul.f32 %v1192, %v1206
    %v1209 = vmul.f32 %v1193, %v1207
    %v1210 = vmul.f32 %v1208, %v1184
    %v1211 = vmul.f32 %v1209, %v1190
    %v1212 = vld [vmem:[%s6] sm:$0xff]
    %v1213 = vld [vmem:[%s6 + $0x8] sm:$0xff]
    %v1214 = vld [vmem:[%s6 + $0x10] sm:$0xff]
    %v1215 = vld [vmem:[%s6 + $0x18] sm:$0xff]
    %v1216 = vld [vmem:[%s6 + $0x20] sm:$0xff]
    %v1217 = vld [vmem:[%s6 + $0x28] sm:$0xff]
    %v1218 = vld [vmem:[%s6 + $0x30] sm:$0xff]
    %v1219 = vld [vmem:[%s6 + $0x38] sm:$0xff]
    %v1220 = vld [vmem:[%s6 + $0x40] sm:$0xff]
    %v1221 = vld [vmem:[%s6 + $0x48] sm:$0xff]
    %v1222 = vld [vmem:[%s6 + $0x50] sm:$0xff]
    %v1223 = vld [vmem:[%s6 + $0x58] sm:$0xff]
    %v1224 = vld [vmem:[%s6 + $0x60] sm:$0xff]
    %v1225 = vld [vmem:[%s6 + $0x68] sm:$0xff]
    %v1226 = vld [vmem:[%s6 + $0x70] sm:$0xff]
    %v1227 = vld [vmem:[%s6 + $0x78] sm:$0xff]
    %1228 = vmatprep.subr.mxu0 0.0
    %1229 = vmatpush1.msra.mxu0 %v1212
    %1230 = vmatprep.subr.mxu0 0.0
    %1231 = vmatpush1.msra.mxu0 %v1213
    %1232 = vmatprep.subr.mxu0 0.0
    %1233 = vmatpush1.msra.mxu0 %v1214
    %1234 = vmatprep.subr.mxu0 0.0
    %1235 = vmatpush1.msra.mxu0 %v1215
    %1236 = vmatprep.subr.mxu0 0.0
    %1237 = vmatpush1.msra.mxu0 %v1216
    %1238 = vmatprep.subr.mxu0 0.0
    %1239 = vmatpush1.msra.mxu0 %v1217
    %1240 = vmatprep.subr.mxu0 0.0
    %1241 = vmatpush1.msra.mxu0 %v1218
    %1242 = vmatprep.subr.mxu0 0.0
    %1243 = vmatpush1.msra.mxu0 %v1219
    %1244 = vmatprep.subr.mxu0 0.0
    %1245 = vmatpush1.msra.mxu0 %v1220
    %1246 = vmatprep.subr.mxu0 0.0
    %1247 = vmatpush1.msra.mxu0 %v1221
    %1248 = vmatprep.subr.mxu0 0.0
    %1249 = vmatpush1.msra.mxu0 %v1222
    %1250 = vmatprep.subr.mxu0 0.0
    %1251 = vmatpush1.msra.mxu0 %v1223
    %1252 = vmatprep.subr.mxu0 0.0
    %1253 = vmatpush1.msra.mxu0 %v1224
    %1254 = vmatprep.subr.mxu0 0.0
    %1255 = vmatpush1.msra.mxu0 %v1225
    %1256 = vmatprep.subr.mxu0 0.0
    %1257 = vmatpush1.msra.mxu0 %v1226
    %1258 = vmatprep.subr.mxu0 0.0
    %1259 = vmatpush1.msra.mxu0 %v1227
    %1260 = vmatprep.subr.mxu0 0.0
    %1261 = vmatpush1.msra.mxu0 0.0
    %1262 = vmatprep.subr.mxu0 0.0
    %1263 = vmatpush1.msra.mxu0 0.0
    %1264 = vmatprep.subr.mxu0 0.0
    %1265 = vmatpush1.msra.mxu0 0.0
    %1266 = vmatprep.subr.mxu0 0.0
    %1267 = vmatpush1.msra.mxu0 0.0
    %1268 = vmatprep.subr.mxu0 0.0
    %1269 = vmatpush1.msra.mxu0 0.0
    %1270 = vmatprep.subr.mxu0 0.0
    %1271 = vmatpush1.msra.mxu0 0.0
    %1272 = vmatprep.subr.mxu0 0.0
    %1273 = vmatpush1.msra.mxu0 0.0
    %1274 = vmatprep.subr.mxu0 0.0
    %1275 = vmatpush1.msra.mxu0 0.0
    %1276 = vmatprep.subr.mxu0 0.0
    %1277 = vmatpush1.msra.mxu0 0.0
    %1278 = vmatprep.subr.mxu0 0.0
    %1279 = vmatpush1.msra.mxu0 0.0
    %1280 = vmatprep.subr.mxu0 0.0
    %1281 = vmatpush1.msra.mxu0 0.0
    %1282 = vmatprep.subr.mxu0 0.0
    %1283 = vmatpush1.msra.mxu0 0.0
    %1284 = vmatprep.subr.mxu0 0.0
    %1285 = vmatpush1.msra.mxu0 0.0
    %1286 = vmatprep.subr.mxu0 0.0
    %1287 = vmatpush1.msra.mxu0 0.0
    %1288 = vmatprep.subr.mxu0 0.0
    %1289 = vmatpush1.msra.mxu0 0.0
    %1290 = vmatprep.subr.mxu0 0.0
    %1291 = vmatpush1.msra.mxu0 0.0
    %1292 = vmatprep.mubr.f32.mxu0 0.0
    %1293 = vmatmul.mubr.f32.gmra.mrb[0].mxu0 %v1210
    %v1294 = vpop.f32.mrb[0].mxu0
    %v1295 = vadd.f32 0.0, %v1294
    %v1296 = vpop.f32.mrb[0].mxu0
    %1297 = vmatprep.mubr.f32.mxu0 0.0
    %1298 = vmatmul.mubr.f32.gmra.mrb[0].mxu0 %v1211
    %v1299 = vpop.f32.mrb[0].mxu0
    %v1300 = vadd.f32 0.0, %v1299
    %v1301 = vpop.f32.mrb[0].mxu0
    %1302 = vdwg.mxu0
    %v1303 = vadd.f32 %v1049, %v1295
    %v1304 = vadd.f32 %v1050, %v1300
    %v1305 = vlaneseq
    %v1306 = vshrl.u32 %v1305, 7
    %v1307 = vsub.s32 0, %v1306
    %v1308 = vrot.slane %v81, %v1307
    %v1309 = vadd.f32 %v1303, %v1308
    %v1310 = vadd.f32 %v1304, %v1308
    %1311 = vst.msk [vmem:[#allocation8] sm:$0xff] %vm82, %v1309
    %1312 = vst.msk [vmem:[#allocation8 + $0x8] sm:$0xff] %vm82, %v1310
    // Predicated region
    $region54: #{tpu_custom_call.1} parent=1 // pred_check
      _
    $region55: #{tpu_custom_call.1} parent=1 // pred_check_branch
      %1314 = sbr.rel (0) target = $region57
    $region56: #{tpu_custom_call.1} parent=1 // pred_region
      %s1316 = ssub.s32 256, 256
      %1317 = vsyncadd [#allocation4], %s1316
      %s1318 = sshll.u32 [#allocation8], 4
      %s1319 = int_to_ptr.vmem [resolvable:$true] %s1318
      %1324 = dma.vmem_to_hbm [thread:$0]  %s1319, 256, %s10, [#allocation4], 128, 128, 8
    $region57: #{tpu_custom_call.1} parent=1 // pred_fallthru
      _
    // Predicated region
    $region58: #{tpu_custom_call.1} parent=1 // pred_check
      _
    $region59: #{tpu_custom_call.1} parent=1 // pred_check_branch
      %1326 = sbr.rel (0) target = $region61
    $region60: #{tpu_custom_call.1} parent=1 // pred_region
      %1327 = dma.done [#allocation4], 256
    $region61: #{tpu_custom_call.1} parent=1 // pred_fallthru
      _
    %1328 = vsyncpa [#allocation3], 1
    %1329 = vsyncpa [#allocation6], 1
    %1330 = vsyncpa [#allocation4], 1

</llo_original>
